<compile_context>
chip_gen: v7x
topology: tpu7x:2x2x1
jax: 0.10.0
libtpu: 0.0.40
codegen_flags: <defaults>
</compile_context>

<pallas_src>
import numpy as np
import jax
import jax.numpy as jnp
from jax.experimental import pallas as pl
from jax.experimental.pallas import tpu as pltpu

# ---------------- config (small, deterministic) ----------------
B, S = 2, 8                 # batch, sequence length
H, NH, DH = 32, 2, 16       # hidden, num heads, head dim (NH * DH == H)
FFN = 64                    # intermediate size (4 * H)
VOCAB, TYPE_VOCAB, MAX_POS = 50, 2, 16
VOCAB_PAD = 64              # padded vocab rows for the one-hot gather
LAYERS = 2
NUM_CLASSES = 2
LOGIT_PAD = 128             # lane-dense logits slab width
LN_EPS = 1e-12              # BERT LayerNorm eps
BS = B * S
ATTN_SCALE = 1.0 / (DH ** 0.5)
LANES = 128


# ---------------- packed-parameter row layout (static) ----------------
def _make_layout(entries, align):
    layout, off = {}, 0
    for name, nrows, ncols in entries:
        off = ((off + align - 1) // align) * align
        layout[name] = (off, nrows, ncols)
        off += nrows
    total = ((off + align - 1) // align) * align
    return layout, total


_W_ENTRIES = [("word_emb", VOCAB_PAD, H)]
for _l in range(LAYERS):
    _W_ENTRIES += [(f"wqkv{_l}", H, 3 * H), (f"wo{_l}", H, H),
                   (f"w1{_l}", H, FFN), (f"w2{_l}", FFN, H)]
_W_ENTRIES += [("pooler_w", H, H), ("cls_w", H, LOGIT_PAD)]
W_LAYOUT, W_ROWS = _make_layout(_W_ENTRIES, 16)   # bf16: align to 16 sublanes

_V_ENTRIES = [("emb_sum", BS, H), ("emb_ln_g", 1, H), ("emb_ln_b", 1, H)]
for _l in range(LAYERS):
    _V_ENTRIES += [(f"bqkv{_l}", 1, 3 * H), (f"bo{_l}", 1, H),
                   (f"ln1_g{_l}", 1, H), (f"ln1_b{_l}", 1, H),
                   (f"b1{_l}", 1, FFN), (f"b2{_l}", 1, H),
                   (f"ln2_g{_l}", 1, H), (f"ln2_b{_l}", 1, H)]
_V_ENTRIES += [("pooler_b", 1, H), ("cls_b", 1, LOGIT_PAD)]
V_LAYOUT, V_ROWS = _make_layout(_V_ENTRIES, 8)    # f32: align to 8 sublanes


# ---------------- fused whole-model kernel ----------------
def _layer_norm(x, g, b):
    mu = jnp.mean(x, axis=-1, keepdims=True)
    xc = x - mu
    var = jnp.mean(xc * xc, axis=-1, keepdims=True)
    return xc * jax.lax.rsqrt(var + LN_EPS) * g + b


def _bert_kernel(ids_ref, mask_ref, w_ref, v_ref, out_ref):
    f32 = jnp.float32
    bf16 = jnp.bfloat16

    def W(name, r0=0, nrows=None):
        base, nr, nc = W_LAYOUT[name]
        if nrows is None:
            nrows = nr
        return w_ref[base + r0: base + r0 + nrows, :nc]     # bf16 slice

    def V(name):
        base, nr, nc = V_LAYOUT[name]
        return v_ref[base: base + nr, :nc]                   # f32 slice

    # ---- embeddings: in-kernel vocab gather via one-hot matmul (MXU) ----
    ids = ids_ref[...]                                               # (BS, 1) i32
    vocab_ids = jax.lax.broadcasted_iota(jnp.int32, (BS, VOCAB_PAD), 1)
    onehot = (ids == vocab_ids).astype(bf16)                         # (BS, VOCAB_PAD)
    x = jnp.dot(onehot, W("word_emb"), preferred_element_type=f32)   # (BS, H)
    x = x + V("emb_sum")                                             # pos + type0 pre-added
    x = _layer_norm(x, V("emb_ln_g"), V("emb_ln_b"))

    # additive key-padding bias, HF convention: (1 - mask) * -10000
    bias3 = ((1.0 - mask_ref[...]) * -10000.0)[:, None, :]           # (B, 1, S)

    # ---- encoder layers (statically unrolled; fine at L=2) ----
    # TODO(synk): at 12 layers use a grid axis / lax.fori_loop over stacked
    # weights instead of static unroll (vreg pressure + weight streaming).
    for l in range(LAYERS):
        # fused QKV projection (scale already folded into Q weight + bias)
        qkv = jnp.dot(x.astype(bf16), W(f"wqkv{l}"),
                      preferred_element_type=f32) + V(f"bqkv{l}")    # (BS, 3H)
        qkv3 = qkv.reshape(B, S, 3 * H)                              # (B, S, 3H)

        # multi-head attention: batched over B per head; head outputs are
        # accumulated straight through the output projection (no concats).
        attn = jnp.zeros((BS, H), f32)
        for h in range(NH):
            c = h * DH
            q_h = qkv3[:, :, c:c + DH].astype(bf16)                  # (B, S, DH)
            k_h = qkv3[:, :, H + c:H + c + DH].astype(bf16)
            v_h = qkv3[:, :, 2 * H + c:2 * H + c + DH].astype(bf16)
            s = jnp.einsum('bqd,bkd->bqk', q_h, k_h,
                           preferred_element_type=f32) + bias3       # (B, S, S)
            m = jnp.max(s, axis=-1, keepdims=True)
            p = jnp.exp(s - m)
            p = p * pl.reciprocal(jnp.sum(p, axis=-1, keepdims=True),
                                  approx=True)
            ctx_h = jnp.einsum('bqk,bkd->bqd', p.astype(bf16), v_h,
                               preferred_element_type=f32)           # (B, S, DH)
            attn = attn + jnp.dot(ctx_h.reshape(BS, DH).astype(bf16),
                                  W(f"wo{l}", c, DH),
                                  preferred_element_type=f32)        # (BS, H)

        x = _layer_norm(attn + V(f"bo{l}") + x, V(f"ln1_g{l}"), V(f"ln1_b{l}"))

        ff = jnp.dot(x.astype(bf16), W(f"w1{l}"),
                     preferred_element_type=f32) + V(f"b1{l}")
        # TODO(synk): HF bert-base uses exact erf GELU; tanh approximation here.
        ff = jax.nn.gelu(ff, approximate=True)
        ff = jnp.dot(ff.astype(bf16), W(f"w2{l}"),
                     preferred_element_type=f32) + V(f"b2{l}")
        x = _layer_norm(ff + x, V(f"ln2_g{l}"), V(f"ln2_b{l}"))

    # ---- pooler on the [CLS] tokens (single strided row gather) ----
    cls_tok = x.reshape(B, S, H)[:, 0, :]                            # (B, H)
    pooled = jnp.tanh(jnp.dot(cls_tok.astype(bf16), W("pooler_w"),
                              preferred_element_type=f32) + V("pooler_b"))

    # TODO(synk): nn.Dropout(0.5) treated as inference-mode identity (eval()).
    # classifier head: relu(linear(.)) into a lane-dense (B, 128) slab
    logits = jnp.dot(pooled.astype(bf16), W("cls_w"),
                     preferred_element_type=f32) + V("cls_b")
    out_ref[...] = jnp.maximum(logits, 0.0)


# ---------------- cost estimate (advisory) ----------------
_MM_FLOPS = int(
    2 * BS * VOCAB_PAD * H
    + LAYERS * (2 * BS * H * (3 * H)
                + NH * (2 * B * S * S * DH) * 2        # scores + context
                + NH * (2 * BS * DH * H)               # output-proj partials
                + 2 * BS * H * FFN + 2 * BS * FFN * H)
    + 2 * B * H * H + 2 * B * H * LOGIT_PAD)
_TRANSCEND = int(LAYERS * (B * NH * S * S + BS * FFN) + B * H
                 + BS * (2 * LAYERS + 1))
_BYTES = int(BS * 4 + B * S * 4 + W_ROWS * LANES * 2 + V_ROWS * LANES * 4
             + B * LOGIT_PAD * 4)


# ---------------- wrapper ----------------
def bert_classifier_forward(packed, input_ids, mask):
    """input_ids: (B, S) int32; mask: (B, S) {0,1}. Returns (B, NUM_CLASSES) f32."""
    ids = input_ids.reshape(BS, 1).astype(jnp.int32)
    mask_f = mask.astype(jnp.float32)

    logits_pad = pl.pallas_call(
        _bert_kernel,
        out_shape=jax.ShapeDtypeStruct((B, LOGIT_PAD), jnp.float32),
        in_specs=[pl.BlockSpec(memory_space=pltpu.MemorySpace.VMEM)] * 4,
        out_specs=pl.BlockSpec(memory_space=pltpu.MemorySpace.VMEM),
        cost_estimate=pl.CostEstimate(flops=_MM_FLOPS,
                                      transcendentals=_TRANSCEND,
                                      bytes_accessed=_BYTES),
    )(ids, mask_f, packed["wbuf"], packed["vbuf"])
    return logits_pad[:, :NUM_CLASSES]


# ---------------- deterministic parameter construction ----------------
def init_params(key):
    def nrm(key, shape, scale=0.02):
        return (scale * jax.random.normal(key, shape)).astype(jnp.float32)

    keys = iter(jax.random.split(key, 8 + LAYERS * 16))
    p = {
        "word_emb": nrm(next(keys), (VOCAB, H)),
        "pos_emb": nrm(next(keys), (MAX_POS, H)),
        "type_emb": nrm(next(keys), (TYPE_VOCAB, H)),
        "emb_ln_g": jnp.ones((H,), jnp.float32),
        "emb_ln_b": jnp.zeros((H,), jnp.float32),
        "pooler_w": nrm(next(keys), (H, H)),
        "pooler_b": jnp.zeros((H,), jnp.float32),
        "cls_w": nrm(next(keys), (H, NUM_CLASSES)),
        "cls_b": jnp.zeros((NUM_CLASSES,), jnp.float32),
        "layers": [],
    }
    for _ in range(LAYERS):
        lp = {
            "wq": nrm(next(keys), (H, H)), "bq": jnp.zeros((H,), jnp.float32),
            "wk": nrm(next(keys), (H, H)), "bk": jnp.zeros((H,), jnp.float32),
            "wv": nrm(next(keys), (H, H)), "bv": jnp.zeros((H,), jnp.float32),
            "wo": nrm(next(keys), (H, H)), "bo": jnp.zeros((H,), jnp.float32),
            "ln1_g": jnp.ones((H,), jnp.float32), "ln1_b": jnp.zeros((H,), jnp.float32),
            "w1": nrm(next(keys), (H, FFN)), "b1": jnp.zeros((FFN,), jnp.float32),
            "w2": nrm(next(keys), (FFN, H)), "b2": jnp.zeros((H,), jnp.float32),
            "ln2_g": jnp.ones((H,), jnp.float32), "ln2_b": jnp.zeros((H,), jnp.float32),
        }
        p["layers"].append(lp)
    return p


def pack_params(p):
    """Pack all weights into two lane-dense slabs (bf16 matmul weights, f32 vectors)."""
    wbuf = np.zeros((W_ROWS, LANES), np.float32)
    vbuf = np.zeros((V_ROWS, LANES), np.float32)

    def put(buf, layout, name, arr):
        arr = np.asarray(arr, np.float32)
        if arr.ndim == 1:
            arr = arr[None, :]
        r, nr, nc = layout[name]
        assert arr.shape == (nr, nc), (name, arr.shape, (nr, nc))
        buf[r:r + nr, :nc] = arr

    putW = lambda n, a: put(wbuf, W_LAYOUT, n, a)
    putV = lambda n, a: put(vbuf, V_LAYOUT, n, a)

    # word embeddings, padded to VOCAB_PAD rows (extra rows stay zero)
    we = np.zeros((VOCAB_PAD, H), np.float32)
    we[:VOCAB] = np.asarray(p["word_emb"], np.float32)
    putW("word_emb", we)

    # positional + token-type(0) embeddings pre-added into one (BS, H) slab
    pos = np.asarray(p["pos_emb"][:S], np.float32)
    typ = np.asarray(p["type_emb"][0], np.float32)
    putV("emb_sum", np.tile(pos, (B, 1)) + typ[None, :])
    putV("emb_ln_g", p["emb_ln_g"])
    putV("emb_ln_b", p["emb_ln_b"])

    for l, lp in enumerate(p["layers"]):
        # fold 1/sqrt(DH) into the Q projection (weight AND bias)
        wq = np.asarray(lp["wq"], np.float32) * ATTN_SCALE
        bq = np.asarray(lp["bq"], np.float32) * ATTN_SCALE
        wqkv = np.concatenate([wq, np.asarray(lp["wk"], np.float32),
                               np.asarray(lp["wv"], np.float32)], axis=1)
        bqkv = np.concatenate([bq, np.asarray(lp["bk"], np.float32),
                               np.asarray(lp["bv"], np.float32)])
        putW(f"wqkv{l}", wqkv); putV(f"bqkv{l}", bqkv)
        putW(f"wo{l}", lp["wo"]); putV(f"bo{l}", lp["bo"])
        putV(f"ln1_g{l}", lp["ln1_g"]); putV(f"ln1_b{l}", lp["ln1_b"])
        putW(f"w1{l}", lp["w1"]); putV(f"b1{l}", lp["b1"])
        putW(f"w2{l}", lp["w2"]); putV(f"b2{l}", lp["b2"])
        putV(f"ln2_g{l}", lp["ln2_g"]); putV(f"ln2_b{l}", lp["ln2_b"])

    putW("pooler_w", p["pooler_w"]); putV("pooler_b", p["pooler_b"])
    cls_w = np.zeros((H, LOGIT_PAD), np.float32)
    cls_w[:, :NUM_CLASSES] = np.asarray(p["cls_w"], np.float32)
    putW("cls_w", cls_w)
    cls_b = np.zeros((LOGIT_PAD,), np.float32)
    cls_b[:NUM_CLASSES] = np.asarray(p["cls_b"], np.float32)
    putV("cls_b", cls_b)

    return dict(wbuf=jnp.asarray(wbuf, jnp.bfloat16),
                vbuf=jnp.asarray(vbuf, jnp.float32))


if __name__ == "__main__":
    key = jax.random.PRNGKey(0)
    k_params, k_ids = jax.random.split(key)
    packed = pack_params(init_params(k_params))

    input_ids = jax.random.randint(k_ids, (B, S), 0, VOCAB, dtype=jnp.int32)
    # attention mask: batch 0 fully valid, batch 1 has 2 padding tokens at the end
    mask = jnp.array([[1, 1, 1, 1, 1, 1, 1, 1],
                      [1, 1, 1, 1, 1, 1, 0, 0]], dtype=jnp.int32)

    fwd = jax.jit(bert_classifier_forward)
    out = fwd(packed, input_ids, mask)
    out = jax.block_until_ready(out)
    assert out.shape == (B, NUM_CLASSES) and out.dtype == jnp.float32
    assert bool(jnp.all(out >= 0.0))           # ReLU output is non-negative
    assert bool(jnp.all(jnp.isfinite(out)))
    print("KERNEL_OK")
</pallas_src>

<mosaic_0001>
module attributes {stable_mosaic.version = 11 : i64} {
  func.func @_bert_kernel(%arg0: memref<16x1xi32, #tpu.memory_space<vmem>>, %arg1: memref<2x8xf32, #tpu.memory_space<vmem>>, %arg2: memref<448x128xbf16, #tpu.memory_space<vmem>>, %arg3: memref<176x128xf32, #tpu.memory_space<vmem>>, %arg4: memref<2x128xf32, #tpu.memory_space<vmem>>) attributes {dimension_semantics = [], scalar_prefetch = 0 : i64, scratch_operands = 0 : i64, tpu.core_type = #tpu.core_type<tc>} {
    %c0 = arith.constant 0 : index
    %c0_0 = arith.constant 0 : index
    %0 = vector.load %arg0[%c0, %c0_0] : memref<16x1xi32, #tpu.memory_space<vmem>>, vector<16x1xi32>
    %1 = tpu.iota {dimensions = array<i32: 1>} : vector<16x64xi32>
    %2 = vector.broadcast %0 : vector<16x1xi32> to vector<16x64xi32>
    %3 = arith.cmpi eq, %2, %1 : vector<16x64xi32>
    %4 = arith.extui %3 : vector<16x64xi1> to vector<16x64xi32>
    %5 = arith.sitofp %4 : vector<16x64xi32> to vector<16x64xf32>
    %6 = arith.truncf %5 : vector<16x64xf32> to vector<16x64xbf16>
    %c0_1 = arith.constant 0 : index
    %c0_2 = arith.constant 0 : index
    %7 = vector.load %arg2[%c0_1, %c0_2] : memref<448x128xbf16, #tpu.memory_space<vmem>>, vector<64x32xbf16>
    %cst = arith.constant dense<0.000000e+00> : vector<16x32xf32>
    %8 = tpu.matmul %6, %7, %cst {dimension_numbers = #tpu.dot_dimension_numbers<[1], [0], [0], [1], [0, 0, 1, 1], [], []>} : vector<16x64xbf16>, vector<64x32xbf16>, vector<16x32xf32> -> vector<16x32xf32>
    %c0_3 = arith.constant 0 : index
    %c0_4 = arith.constant 0 : index
    %9 = vector.load %arg3[%c0_3, %c0_4] : memref<176x128xf32, #tpu.memory_space<vmem>>, vector<16x32xf32>
    %10 = arith.addf %8, %9 : vector<16x32xf32>
    %c16 = arith.constant 16 : index
    %c0_5 = arith.constant 0 : index
    %11 = vector.load %arg3[%c16, %c0_5] : memref<176x128xf32, #tpu.memory_space<vmem>>, vector<1x32xf32>
    %c24 = arith.constant 24 : index
    %c0_6 = arith.constant 0 : index
    %12 = vector.load %arg3[%c24, %c0_6] : memref<176x128xf32, #tpu.memory_space<vmem>>, vector<1x32xf32>
    %cst_7 = arith.constant dense<0.000000e+00> : vector<16xf32>
    %13 = vector.multi_reduction <add>, %10, %cst_7 [1] : vector<16x32xf32> to vector<16xf32>
    %14 = vector.shape_cast %13 : vector<16xf32> to vector<16x1xf32>
    %cst_8 = arith.constant 3.200000e+01 : f32
    %15 = vector.broadcast %cst_8 : f32 to vector<16x1xf32>
    %16 = arith.divf %14, %15 : vector<16x1xf32>
    %17 = vector.broadcast %16 : vector<16x1xf32> to vector<16x32xf32>
    %18 = arith.subf %10, %17 : vector<16x32xf32>
    %19 = arith.mulf %18, %18 : vector<16x32xf32>
    %cst_9 = arith.constant dense<0.000000e+00> : vector<16xf32>
    %20 = vector.multi_reduction <add>, %19, %cst_9 [1] : vector<16x32xf32> to vector<16xf32>
    %21 = vector.shape_cast %20 : vector<16xf32> to vector<16x1xf32>
    %cst_10 = arith.constant 3.200000e+01 : f32
    %22 = vector.broadcast %cst_10 : f32 to vector<16x1xf32>
    %23 = arith.divf %21, %22 : vector<16x1xf32>
    %cst_11 = arith.constant 9.99999996E-13 : f32
    %24 = vector.broadcast %cst_11 : f32 to vector<16x1xf32>
    %25 = arith.addf %23, %24 : vector<16x1xf32>
    %26 = math.rsqrt %25 : vector<16x1xf32>
    %27 = vector.broadcast %26 : vector<16x1xf32> to vector<16x32xf32>
    %28 = arith.mulf %18, %27 : vector<16x32xf32>
    %29 = vector.broadcast %11 : vector<1x32xf32> to vector<16x32xf32>
    %30 = arith.mulf %28, %29 : vector<16x32xf32>
    %31 = vector.broadcast %12 : vector<1x32xf32> to vector<16x32xf32>
    %32 = arith.addf %30, %31 : vector<16x32xf32>
    %c0_12 = arith.constant 0 : index
    %c0_13 = arith.constant 0 : index
    %33 = vector.load %arg1[%c0_12, %c0_13] : memref<2x8xf32, #tpu.memory_space<vmem>>, vector<2x8xf32>
    %cst_14 = arith.constant 1.000000e+00 : f32
    %34 = vector.broadcast %cst_14 : f32 to vector<2x8xf32>
    %35 = arith.subf %34, %33 : vector<2x8xf32>
    %cst_15 = arith.constant -1.000000e+04 : f32
    %36 = vector.broadcast %cst_15 : f32 to vector<2x8xf32>
    %37 = arith.mulf %35, %36 : vector<2x8xf32>
    %38 = vector.shape_cast %37 : vector<2x8xf32> to vector<2x1x8xf32>
    %39 = arith.truncf %32 : vector<16x32xf32> to vector<16x32xbf16>
    %c64 = arith.constant 64 : index
    %c0_16 = arith.constant 0 : index
    %40 = vector.load %arg2[%c64, %c0_16] : memref<448x128xbf16, #tpu.memory_space<vmem>>, vector<32x96xbf16>
    %cst_17 = arith.constant dense<0.000000e+00> : vector<16x96xf32>
    %41 = tpu.matmul %39, %40, %cst_17 {dimension_numbers = #tpu.dot_dimension_numbers<[1], [0], [0], [1], [0, 0, 1, 1], [], []>} : vector<16x32xbf16>, vector<32x96xbf16>, vector<16x96xf32> -> vector<16x96xf32>
    %c32 = arith.constant 32 : index
    %c0_18 = arith.constant 0 : index
    %42 = vector.load %arg3[%c32, %c0_18] : memref<176x128xf32, #tpu.memory_space<vmem>>, vector<1x96xf32>
    %43 = vector.broadcast %42 : vector<1x96xf32> to vector<16x96xf32>
    %44 = arith.addf %41, %43 : vector<16x96xf32>
    %45 = vector.shape_cast %44 : vector<16x96xf32> to vector<2x8x96xf32>
    %cst_19 = arith.constant 0.000000e+00 : f32
    %46 = vector.broadcast %cst_19 : f32 to vector<16x32xf32>
    %47 = vector.extract_strided_slice %45 {offsets = [0, 0, 0], sizes = [2, 8, 16], strides = [1, 1, 1]} : vector<2x8x96xf32> to vector<2x8x16xf32>
    %48 = arith.truncf %47 : vector<2x8x16xf32> to vector<2x8x16xbf16>
    %49 = vector.extract_strided_slice %45 {offsets = [0, 0, 32], sizes = [2, 8, 16], strides = [1, 1, 1]} : vector<2x8x96xf32> to vector<2x8x16xf32>
    %50 = arith.truncf %49 : vector<2x8x16xf32> to vector<2x8x16xbf16>
    %51 = vector.extract_strided_slice %45 {offsets = [0, 0, 64], sizes = [2, 8, 16], strides = [1, 1, 1]} : vector<2x8x96xf32> to vector<2x8x16xf32>
    %52 = arith.truncf %51 : vector<2x8x16xf32> to vector<2x8x16xbf16>
    "tpu.trace_start"() <{level = 10 : i32, message = "bqd,bkd->bqk"}> : () -> ()
    %cst_20 = arith.constant dense<0.000000e+00> : vector<2x8x8xf32>
    %53 = tpu.matmul %48, %50, %cst_20 {dimension_numbers = #tpu.dot_dimension_numbers<[2], [2], [1], [1], [0, 0, 0, 1, 1, 1], [0], [0]>} : vector<2x8x16xbf16>, vector<2x8x16xbf16>, vector<2x8x8xf32> -> vector<2x8x8xf32>
    "tpu.trace_stop"() : () -> ()
    %54 = vector.broadcast %38 : vector<2x1x8xf32> to vector<2x8x8xf32>
    %55 = arith.addf %53, %54 : vector<2x8x8xf32>
    %cst_21 = arith.constant dense<0xFF800000> : vector<2x8xf32>
    %56 = vector.multi_reduction <maximumf>, %55, %cst_21 [2] : vector<2x8x8xf32> to vector<2x8xf32>
    %57 = vector.shape_cast %56 : vector<2x8xf32> to vector<2x8x1xf32>
    %58 = vector.broadcast %57 : vector<2x8x1xf32> to vector<2x8x8xf32>
    %59 = arith.subf %55, %58 : vector<2x8x8xf32>
    %60 = math.exp %59 : vector<2x8x8xf32>
    %cst_22 = arith.constant dense<0.000000e+00> : vector<2x8xf32>
    %61 = vector.multi_reduction <add>, %60, %cst_22 [2] : vector<2x8x8xf32> to vector<2x8xf32>
    %62 = vector.shape_cast %61 : vector<2x8xf32> to vector<2x8x1xf32>
    %63 = tpu.reciprocal %62 {approx = true} : vector<2x8x1xf32> -> vector<2x8x1xf32>
    %64 = vector.broadcast %63 : vector<2x8x1xf32> to vector<2x8x8xf32>
    %65 = arith.mulf %60, %64 : vector<2x8x8xf32>
    %66 = arith.truncf %65 : vector<2x8x8xf32> to vector<2x8x8xbf16>
    "tpu.trace_start"() <{level = 10 : i32, message = "bqk,bkd->bqd"}> : () -> ()
    %cst_23 = arith.constant dense<0.000000e+00> : vector<2x8x16xf32>
    %67 = tpu.matmul %66, %52, %cst_23 {dimension_numbers = #tpu.dot_dimension_numbers<[2], [1], [1], [2], [0, 0, 0, 1, 1, 2], [0], [0]>} : vector<2x8x8xbf16>, vector<2x8x16xbf16>, vector<2x8x16xf32> -> vector<2x8x16xf32>
    "tpu.trace_stop"() : () -> ()
    %68 = vector.shape_cast %67 : vector<2x8x16xf32> to vector<16x16xf32>
    %69 = arith.truncf %68 : vector<16x16xf32> to vector<16x16xbf16>
    %c96 = arith.constant 96 : index
    %c0_24 = arith.constant 0 : index
    %70 = vector.load %arg2[%c96, %c0_24] : memref<448x128xbf16, #tpu.memory_space<vmem>>, vector<16x32xbf16>
    %cst_25 = arith.constant dense<0.000000e+00> : vector<16x32xf32>
    %71 = tpu.matmul %69, %70, %cst_25 {dimension_numbers = #tpu.dot_dimension_numbers<[1], [0], [0], [1], [0, 0, 1, 1], [], []>} : vector<16x16xbf16>, vector<16x32xbf16>, vector<16x32xf32> -> vector<16x32xf32>
    %72 = arith.addf %46, %71 : vector<16x32xf32>
    %73 = vector.extract_strided_slice %45 {offsets = [0, 0, 16], sizes = [2, 8, 16], strides = [1, 1, 1]} : vector<2x8x96xf32> to vector<2x8x16xf32>
    %74 = arith.truncf %73 : vector<2x8x16xf32> to vector<2x8x16xbf16>
    %75 = vector.extract_strided_slice %45 {offsets = [0, 0, 48], sizes = [2, 8, 16], strides = [1, 1, 1]} : vector<2x8x96xf32> to vector<2x8x16xf32>
    %76 = arith.truncf %75 : vector<2x8x16xf32> to vector<2x8x16xbf16>
    %77 = vector.extract_strided_slice %45 {offsets = [0, 0, 80], sizes = [2, 8, 16], strides = [1, 1, 1]} : vector<2x8x96xf32> to vector<2x8x16xf32>
    %78 = arith.truncf %77 : vector<2x8x16xf32> to vector<2x8x16xbf16>
    "tpu.trace_start"() <{level = 10 : i32, message = "bqd,bkd->bqk"}> : () -> ()
    %cst_26 = arith.constant dense<0.000000e+00> : vector<2x8x8xf32>
    %79 = tpu.matmul %74, %76, %cst_26 {dimension_numbers = #tpu.dot_dimension_numbers<[2], [2], [1], [1], [0, 0, 0, 1, 1, 1], [0], [0]>} : vector<2x8x16xbf16>, vector<2x8x16xbf16>, vector<2x8x8xf32> -> vector<2x8x8xf32>
    "tpu.trace_stop"() : () -> ()
    %80 = vector.broadcast %38 : vector<2x1x8xf32> to vector<2x8x8xf32>
    %81 = arith.addf %79, %80 : vector<2x8x8xf32>
    %cst_27 = arith.constant dense<0xFF800000> : vector<2x8xf32>
    %82 = vector.multi_reduction <maximumf>, %81, %cst_27 [2] : vector<2x8x8xf32> to vector<2x8xf32>
    %83 = vector.shape_cast %82 : vector<2x8xf32> to vector<2x8x1xf32>
    %84 = vector.broadcast %83 : vector<2x8x1xf32> to vector<2x8x8xf32>
    %85 = arith.subf %81, %84 : vector<2x8x8xf32>
    %86 = math.exp %85 : vector<2x8x8xf32>
    %cst_28 = arith.constant dense<0.000000e+00> : vector<2x8xf32>
    %87 = vector.multi_reduction <add>, %86, %cst_28 [2] : vector<2x8x8xf32> to vector<2x8xf32>
    %88 = vector.shape_cast %87 : vector<2x8xf32> to vector<2x8x1xf32>
    %89 = tpu.reciprocal %88 {approx = true} : vector<2x8x1xf32> -> vector<2x8x1xf32>
    %90 = vector.broadcast %89 : vector<2x8x1xf32> to vector<2x8x8xf32>
    %91 = arith.mulf %86, %90 : vector<2x8x8xf32>
    %92 = arith.truncf %91 : vector<2x8x8xf32> to vector<2x8x8xbf16>
    "tpu.trace_start"() <{level = 10 : i32, message = "bqk,bkd->bqd"}> : () -> ()
    %cst_29 = arith.constant dense<0.000000e+00> : vector<2x8x16xf32>
    %93 = tpu.matmul %92, %78, %cst_29 {dimension_numbers = #tpu.dot_dimension_numbers<[2], [1], [1], [2], [0, 0, 0, 1, 1, 2], [0], [0]>} : vector<2x8x8xbf16>, vector<2x8x16xbf16>, vector<2x8x16xf32> -> vector<2x8x16xf32>
    "tpu.trace_stop"() : () -> ()
    %94 = vector.shape_cast %93 : vector<2x8x16xf32> to vector<16x16xf32>
    %95 = arith.truncf %94 : vector<16x16xf32> to vector<16x16xbf16>
    %c112 = arith.constant 112 : index
    %c0_30 = arith.constant 0 : index
    %96 = vector.load %arg2[%c112, %c0_30] : memref<448x128xbf16, #tpu.memory_space<vmem>>, vector<16x32xbf16>
    %cst_31 = arith.constant dense<0.000000e+00> : vector<16x32xf32>
    %97 = tpu.matmul %95, %96, %cst_31 {dimension_numbers = #tpu.dot_dimension_numbers<[1], [0], [0], [1], [0, 0, 1, 1], [], []>} : vector<16x16xbf16>, vector<16x32xbf16>, vector<16x32xf32> -> vector<16x32xf32>
    %98 = arith.addf %72, %97 : vector<16x32xf32>
    %c40 = arith.constant 40 : index
    %c0_32 = arith.constant 0 : index
    %99 = vector.load %arg3[%c40, %c0_32] : memref<176x128xf32, #tpu.memory_space<vmem>>, vector<1x32xf32>
    %100 = vector.broadcast %99 : vector<1x32xf32> to vector<16x32xf32>
    %101 = arith.addf %98, %100 : vector<16x32xf32>
    %102 = arith.addf %101, %32 : vector<16x32xf32>
    %c48 = arith.constant 48 : index
    %c0_33 = arith.constant 0 : index
    %103 = vector.load %arg3[%c48, %c0_33] : memref<176x128xf32, #tpu.memory_space<vmem>>, vector<1x32xf32>
    %c56 = arith.constant 56 : index
    %c0_34 = arith.constant 0 : index
    %104 = vector.load %arg3[%c56, %c0_34] : memref<176x128xf32, #tpu.memory_space<vmem>>, vector<1x32xf32>
    %cst_35 = arith.constant dense<0.000000e+00> : vector<16xf32>
    %105 = vector.multi_reduction <add>, %102, %cst_35 [1] : vector<16x32xf32> to vector<16xf32>
    %106 = vector.shape_cast %105 : vector<16xf32> to vector<16x1xf32>
    %cst_36 = arith.constant 3.200000e+01 : f32
    %107 = vector.broadcast %cst_36 : f32 to vector<16x1xf32>
    %108 = arith.divf %106, %107 : vector<16x1xf32>
    %109 = vector.broadcast %108 : vector<16x1xf32> to vector<16x32xf32>
    %110 = arith.subf %102, %109 : vector<16x32xf32>
    %111 = arith.mulf %110, %110 : vector<16x32xf32>
    %cst_37 = arith.constant dense<0.000000e+00> : vector<16xf32>
    %112 = vector.multi_reduction <add>, %111, %cst_37 [1] : vector<16x32xf32> to vector<16xf32>
    %113 = vector.shape_cast %112 : vector<16xf32> to vector<16x1xf32>
    %cst_38 = arith.constant 3.200000e+01 : f32
    %114 = vector.broadcast %cst_38 : f32 to vector<16x1xf32>
    %115 = arith.divf %113, %114 : vector<16x1xf32>
    %cst_39 = arith.constant 9.99999996E-13 : f32
    %116 = vector.broadcast %cst_39 : f32 to vector<16x1xf32>
    %117 = arith.addf %115, %116 : vector<16x1xf32>
    %118 = math.rsqrt %117 : vector<16x1xf32>
    %119 = vector.broadcast %118 : vector<16x1xf32> to vector<16x32xf32>
    %120 = arith.mulf %110, %119 : vector<16x32xf32>
    %121 = vector.broadcast %103 : vector<1x32xf32> to vector<16x32xf32>
    %122 = arith.mulf %120, %121 : vector<16x32xf32>
    %123 = vector.broadcast %104 : vector<1x32xf32> to vector<16x32xf32>
    %124 = arith.addf %122, %123 : vector<16x32xf32>
    %125 = arith.truncf %124 : vector<16x32xf32> to vector<16x32xbf16>
    %c128 = arith.constant 128 : index
    %c0_40 = arith.constant 0 : index
    %126 = vector.load %arg2[%c128, %c0_40] : memref<448x128xbf16, #tpu.memory_space<vmem>>, vector<32x64xbf16>
    %cst_41 = arith.constant dense<0.000000e+00> : vector<16x64xf32>
    %127 = tpu.matmul %125, %126, %cst_41 {dimension_numbers = #tpu.dot_dimension_numbers<[1], [0], [0], [1], [0, 0, 1, 1], [], []>} : vector<16x32xbf16>, vector<32x64xbf16>, vector<16x64xf32> -> vector<16x64xf32>
    %c64_42 = arith.constant 64 : index
    %c0_43 = arith.constant 0 : index
    %128 = vector.load %arg3[%c64_42, %c0_43] : memref<176x128xf32, #tpu.memory_space<vmem>>, vector<1x64xf32>
    %129 = vector.broadcast %128 : vector<1x64xf32> to vector<16x64xf32>
    %130 = arith.addf %127, %129 : vector<16x64xf32>
    %131 = arith.mulf %130, %130 : vector<16x64xf32>
    %132 = arith.mulf %130, %131 : vector<16x64xf32>
    %cst_44 = arith.constant 4.471500e-02 : f32
    %133 = vector.broadcast %cst_44 : f32 to vector<16x64xf32>
    %134 = arith.mulf %133, %132 : vector<16x64xf32>
    %135 = arith.addf %130, %134 : vector<16x64xf32>
    %cst_45 = arith.constant 0.797884583 : f32
    %136 = vector.broadcast %cst_45 : f32 to vector<16x64xf32>
    %137 = arith.mulf %136, %135 : vector<16x64xf32>
    %138 = math.tanh %137 : vector<16x64xf32>
    %cst_46 = arith.constant 1.000000e+00 : f32
    %139 = vector.broadcast %cst_46 : f32 to vector<16x64xf32>
    %140 = arith.addf %139, %138 : vector<16x64xf32>
    %cst_47 = arith.constant 5.000000e-01 : f32
    %141 = vector.broadcast %cst_47 : f32 to vector<16x64xf32>
    %142 = arith.mulf %141, %140 : vector<16x64xf32>
    %143 = arith.mulf %130, %142 : vector<16x64xf32>
    %144 = arith.truncf %143 : vector<16x64xf32> to vector<16x64xbf16>
    %c160 = arith.constant 160 : index
    %c0_48 = arith.constant 0 : index
    %145 = vector.load %arg2[%c160, %c0_48] : memref<448x128xbf16, #tpu.memory_space<vmem>>, vector<64x32xbf16>
    %cst_49 = arith.constant dense<0.000000e+00> : vector<16x32xf32>
    %146 = tpu.matmul %144, %145, %cst_49 {dimension_numbers = #tpu.dot_dimension_numbers<[1], [0], [0], [1], [0, 0, 1, 1], [], []>} : vector<16x64xbf16>, vector<64x32xbf16>, vector<16x32xf32> -> vector<16x32xf32>
    %c72 = arith.constant 72 : index
    %c0_50 = arith.constant 0 : index
    %147 = vector.load %arg3[%c72, %c0_50] : memref<176x128xf32, #tpu.memory_space<vmem>>, vector<1x32xf32>
    %148 = vector.broadcast %147 : vector<1x32xf32> to vector<16x32xf32>
    %149 = arith.addf %146, %148 : vector<16x32xf32>
    %150 = arith.addf %149, %124 : vector<16x32xf32>
    %c80 = arith.constant 80 : index
    %c0_51 = arith.constant 0 : index
    %151 = vector.load %arg3[%c80, %c0_51] : memref<176x128xf32, #tpu.memory_space<vmem>>, vector<1x32xf32>
    %c88 = arith.constant 88 : index
    %c0_52 = arith.constant 0 : index
    %152 = vector.load %arg3[%c88, %c0_52] : memref<176x128xf32, #tpu.memory_space<vmem>>, vector<1x32xf32>
    %cst_53 = arith.constant dense<0.000000e+00> : vector<16xf32>
    %153 = vector.multi_reduction <add>, %150, %cst_53 [1] : vector<16x32xf32> to vector<16xf32>
    %154 = vector.shape_cast %153 : vector<16xf32> to vector<16x1xf32>
    %cst_54 = arith.constant 3.200000e+01 : f32
    %155 = vector.broadcast %cst_54 : f32 to vector<16x1xf32>
    %156 = arith.divf %154, %155 : vector<16x1xf32>
    %157 = vector.broadcast %156 : vector<16x1xf32> to vector<16x32xf32>
    %158 = arith.subf %150, %157 : vector<16x32xf32>
    %159 = arith.mulf %158, %158 : vector<16x32xf32>
    %cst_55 = arith.constant dense<0.000000e+00> : vector<16xf32>
    %160 = vector.multi_reduction <add>, %159, %cst_55 [1] : vector<16x32xf32> to vector<16xf32>
    %161 = vector.shape_cast %160 : vector<16xf32> to vector<16x1xf32>
    %cst_56 = arith.constant 3.200000e+01 : f32
    %162 = vector.broadcast %cst_56 : f32 to vector<16x1xf32>
    %163 = arith.divf %161, %162 : vector<16x1xf32>
    %cst_57 = arith.constant 9.99999996E-13 : f32
    %164 = vector.broadcast %cst_57 : f32 to vector<16x1xf32>
    %165 = arith.addf %163, %164 : vector<16x1xf32>
    %166 = math.rsqrt %165 : vector<16x1xf32>
    %167 = vector.broadcast %166 : vector<16x1xf32> to vector<16x32xf32>
    %168 = arith.mulf %158, %167 : vector<16x32xf32>
    %169 = vector.broadcast %151 : vector<1x32xf32> to vector<16x32xf32>
    %170 = arith.mulf %168, %169 : vector<16x32xf32>
    %171 = vector.broadcast %152 : vector<1x32xf32> to vector<16x32xf32>
    %172 = arith.addf %170, %171 : vector<16x32xf32>
    %173 = arith.truncf %172 : vector<16x32xf32> to vector<16x32xbf16>
    %c224 = arith.constant 224 : index
    %c0_58 = arith.constant 0 : index
    %174 = vector.load %arg2[%c224, %c0_58] : memref<448x128xbf16, #tpu.memory_space<vmem>>, vector<32x96xbf16>
    %cst_59 = arith.constant dense<0.000000e+00> : vector<16x96xf32>
    %175 = tpu.matmul %173, %174, %cst_59 {dimension_numbers = #tpu.dot_dimension_numbers<[1], [0], [0], [1], [0, 0, 1, 1], [], []>} : vector<16x32xbf16>, vector<32x96xbf16>, vector<16x96xf32> -> vector<16x96xf32>
    %c96_60 = arith.constant 96 : index
    %c0_61 = arith.constant 0 : index
    %176 = vector.load %arg3[%c96_60, %c0_61] : memref<176x128xf32, #tpu.memory_space<vmem>>, vector<1x96xf32>
    %177 = vector.broadcast %176 : vector<1x96xf32> to vector<16x96xf32>
    %178 = arith.addf %175, %177 : vector<16x96xf32>
    %179 = vector.shape_cast %178 : vector<16x96xf32> to vector<2x8x96xf32>
    %cst_62 = arith.constant 0.000000e+00 : f32
    %180 = vector.broadcast %cst_62 : f32 to vector<16x32xf32>
    %181 = vector.extract_strided_slice %179 {offsets = [0, 0, 0], sizes = [2, 8, 16], strides = [1, 1, 1]} : vector<2x8x96xf32> to vector<2x8x16xf32>
    %182 = arith.truncf %181 : vector<2x8x16xf32> to vector<2x8x16xbf16>
    %183 = vector.extract_strided_slice %179 {offsets = [0, 0, 32], sizes = [2, 8, 16], strides = [1, 1, 1]} : vector<2x8x96xf32> to vector<2x8x16xf32>
    %184 = arith.truncf %183 : vector<2x8x16xf32> to vector<2x8x16xbf16>
    %185 = vector.extract_strided_slice %179 {offsets = [0, 0, 64], sizes = [2, 8, 16], strides = [1, 1, 1]} : vector<2x8x96xf32> to vector<2x8x16xf32>
    %186 = arith.truncf %185 : vector<2x8x16xf32> to vector<2x8x16xbf16>
    "tpu.trace_start"() <{level = 10 : i32, message = "bqd,bkd->bqk"}> : () -> ()
    %cst_63 = arith.constant dense<0.000000e+00> : vector<2x8x8xf32>
    %187 = tpu.matmul %182, %184, %cst_63 {dimension_numbers = #tpu.dot_dimension_numbers<[2], [2], [1], [1], [0, 0, 0, 1, 1, 1], [0], [0]>} : vector<2x8x16xbf16>, vector<2x8x16xbf16>, vector<2x8x8xf32> -> vector<2x8x8xf32>
    "tpu.trace_stop"() : () -> ()
    %188 = vector.broadcast %38 : vector<2x1x8xf32> to vector<2x8x8xf32>
    %189 = arith.addf %187, %188 : vector<2x8x8xf32>
    %cst_64 = arith.constant dense<0xFF800000> : vector<2x8xf32>
    %190 = vector.multi_reduction <maximumf>, %189, %cst_64 [2] : vector<2x8x8xf32> to vector<2x8xf32>
    %191 = vector.shape_cast %190 : vector<2x8xf32> to vector<2x8x1xf32>
    %192 = vector.broadcast %191 : vector<2x8x1xf32> to vector<2x8x8xf32>
    %193 = arith.subf %189, %192 : vector<2x8x8xf32>
    %194 = math.exp %193 : vector<2x8x8xf32>
    %cst_65 = arith.constant dense<0.000000e+00> : vector<2x8xf32>
    %195 = vector.multi_reduction <add>, %194, %cst_65 [2] : vector<2x8x8xf32> to vector<2x8xf32>
    %196 = vector.shape_cast %195 : vector<2x8xf32> to vector<2x8x1xf32>
    %197 = tpu.reciprocal %196 {approx = true} : vector<2x8x1xf32> -> vector<2x8x1xf32>
    %198 = vector.broadcast %197 : vector<2x8x1xf32> to vector<2x8x8xf32>
    %199 = arith.mulf %194, %198 : vector<2x8x8xf32>
    %200 = arith.truncf %199 : vector<2x8x8xf32> to vector<2x8x8xbf16>
    "tpu.trace_start"() <{level = 10 : i32, message = "bqk,bkd->bqd"}> : () -> ()
    %cst_66 = arith.constant dense<0.000000e+00> : vector<2x8x16xf32>
    %201 = tpu.matmul %200, %186, %cst_66 {dimension_numbers = #tpu.dot_dimension_numbers<[2], [1], [1], [2], [0, 0, 0, 1, 1, 2], [0], [0]>} : vector<2x8x8xbf16>, vector<2x8x16xbf16>, vector<2x8x16xf32> -> vector<2x8x16xf32>
    "tpu.trace_stop"() : () -> ()
    %202 = vector.shape_cast %201 : vector<2x8x16xf32> to vector<16x16xf32>
    %203 = arith.truncf %202 : vector<16x16xf32> to vector<16x16xbf16>
    %c256 = arith.constant 256 : index
    %c0_67 = arith.constant 0 : index
    %204 = vector.load %arg2[%c256, %c0_67] : memref<448x128xbf16, #tpu.memory_space<vmem>>, vector<16x32xbf16>
    %cst_68 = arith.constant dense<0.000000e+00> : vector<16x32xf32>
    %205 = tpu.matmul %203, %204, %cst_68 {dimension_numbers = #tpu.dot_dimension_numbers<[1], [0], [0], [1], [0, 0, 1, 1], [], []>} : vector<16x16xbf16>, vector<16x32xbf16>, vector<16x32xf32> -> vector<16x32xf32>
    %206 = arith.addf %180, %205 : vector<16x32xf32>
    %207 = vector.extract_strided_slice %179 {offsets = [0, 0, 16], sizes = [2, 8, 16], strides = [1, 1, 1]} : vector<2x8x96xf32> to vector<2x8x16xf32>
    %208 = arith.truncf %207 : vector<2x8x16xf32> to vector<2x8x16xbf16>
    %209 = vector.extract_strided_slice %179 {offsets = [0, 0, 48], sizes = [2, 8, 16], strides = [1, 1, 1]} : vector<2x8x96xf32> to vector<2x8x16xf32>
    %210 = arith.truncf %209 : vector<2x8x16xf32> to vector<2x8x16xbf16>
    %211 = vector.extract_strided_slice %179 {offsets = [0, 0, 80], sizes = [2, 8, 16], strides = [1, 1, 1]} : vector<2x8x96xf32> to vector<2x8x16xf32>
    %212 = arith.truncf %211 : vector<2x8x16xf32> to vector<2x8x16xbf16>
    "tpu.trace_start"() <{level = 10 : i32, message = "bqd,bkd->bqk"}> : () -> ()
    %cst_69 = arith.constant dense<0.000000e+00> : vector<2x8x8xf32>
    %213 = tpu.matmul %208, %210, %cst_69 {dimension_numbers = #tpu.dot_dimension_numbers<[2], [2], [1], [1], [0, 0, 0, 1, 1, 1], [0], [0]>} : vector<2x8x16xbf16>, vector<2x8x16xbf16>, vector<2x8x8xf32> -> vector<2x8x8xf32>
    "tpu.trace_stop"() : () -> ()
    %214 = vector.broadcast %38 : vector<2x1x8xf32> to vector<2x8x8xf32>
    %215 = arith.addf %213, %214 : vector<2x8x8xf32>
    %cst_70 = arith.constant dense<0xFF800000> : vector<2x8xf32>
    %216 = vector.multi_reduction <maximumf>, %215, %cst_70 [2] : vector<2x8x8xf32> to vector<2x8xf32>
    %217 = vector.shape_cast %216 : vector<2x8xf32> to vector<2x8x1xf32>
    %218 = vector.broadcast %217 : vector<2x8x1xf32> to vector<2x8x8xf32>
    %219 = arith.subf %215, %218 : vector<2x8x8xf32>
    %220 = math.exp %219 : vector<2x8x8xf32>
    %cst_71 = arith.constant dense<0.000000e+00> : vector<2x8xf32>
    %221 = vector.multi_reduction <add>, %220, %cst_71 [2] : vector<2x8x8xf32> to vector<2x8xf32>
    %222 = vector.shape_cast %221 : vector<2x8xf32> to vector<2x8x1xf32>
    %223 = tpu.reciprocal %222 {approx = true} : vector<2x8x1xf32> -> vector<2x8x1xf32>
    %224 = vector.broadcast %223 : vector<2x8x1xf32> to vector<2x8x8xf32>
    %225 = arith.mulf %220, %224 : vector<2x8x8xf32>
    %226 = arith.truncf %225 : vector<2x8x8xf32> to vector<2x8x8xbf16>
    "tpu.trace_start"() <{level = 10 : i32, message = "bqk,bkd->bqd"}> : () -> ()
    %cst_72 = arith.constant dense<0.000000e+00> : vector<2x8x16xf32>
    %227 = tpu.matmul %226, %212, %cst_72 {dimension_numbers = #tpu.dot_dimension_numbers<[2], [1], [1], [2], [0, 0, 0, 1, 1, 2], [0], [0]>} : vector<2x8x8xbf16>, vector<2x8x16xbf16>, vector<2x8x16xf32> -> vector<2x8x16xf32>
    "tpu.trace_stop"() : () -> ()
    %228 = vector.shape_cast %227 : vector<2x8x16xf32> to vector<16x16xf32>
    %229 = arith.truncf %228 : vector<16x16xf32> to vector<16x16xbf16>
    %c272 = arith.constant 272 : index
    %c0_73 = arith.constant 0 : index
    %230 = vector.load %arg2[%c272, %c0_73] : memref<448x128xbf16, #tpu.memory_space<vmem>>, vector<16x32xbf16>
    %cst_74 = arith.constant dense<0.000000e+00> : vector<16x32xf32>
    %231 = tpu.matmul %229, %230, %cst_74 {dimension_numbers = #tpu.dot_dimension_numbers<[1], [0], [0], [1], [0, 0, 1, 1], [], []>} : vector<16x16xbf16>, vector<16x32xbf16>, vector<16x32xf32> -> vector<16x32xf32>
    %232 = arith.addf %206, %231 : vector<16x32xf32>
    %c104 = arith.constant 104 : index
    %c0_75 = arith.constant 0 : index
    %233 = vector.load %arg3[%c104, %c0_75] : memref<176x128xf32, #tpu.memory_space<vmem>>, vector<1x32xf32>
    %234 = vector.broadcast %233 : vector<1x32xf32> to vector<16x32xf32>
    %235 = arith.addf %232, %234 : vector<16x32xf32>
    %236 = arith.addf %235, %172 : vector<16x32xf32>
    %c112_76 = arith.constant 112 : index
    %c0_77 = arith.constant 0 : index
    %237 = vector.load %arg3[%c112_76, %c0_77] : memref<176x128xf32, #tpu.memory_space<vmem>>, vector<1x32xf32>
    %c120 = arith.constant 120 : index
    %c0_78 = arith.constant 0 : index
    %238 = vector.load %arg3[%c120, %c0_78] : memref<176x128xf32, #tpu.memory_space<vmem>>, vector<1x32xf32>
    %cst_79 = arith.constant dense<0.000000e+00> : vector<16xf32>
    %239 = vector.multi_reduction <add>, %236, %cst_79 [1] : vector<16x32xf32> to vector<16xf32>
    %240 = vector.shape_cast %239 : vector<16xf32> to vector<16x1xf32>
    %cst_80 = arith.constant 3.200000e+01 : f32
    %241 = vector.broadcast %cst_80 : f32 to vector<16x1xf32>
    %242 = arith.divf %240, %241 : vector<16x1xf32>
    %243 = vector.broadcast %242 : vector<16x1xf32> to vector<16x32xf32>
    %244 = arith.subf %236, %243 : vector<16x32xf32>
    %245 = arith.mulf %244, %244 : vector<16x32xf32>
    %cst_81 = arith.constant dense<0.000000e+00> : vector<16xf32>
    %246 = vector.multi_reduction <add>, %245, %cst_81 [1] : vector<16x32xf32> to vector<16xf32>
    %247 = vector.shape_cast %246 : vector<16xf32> to vector<16x1xf32>
    %cst_82 = arith.constant 3.200000e+01 : f32
    %248 = vector.broadcast %cst_82 : f32 to vector<16x1xf32>
    %249 = arith.divf %247, %248 : vector<16x1xf32>
    %cst_83 = arith.constant 9.99999996E-13 : f32
    %250 = vector.broadcast %cst_83 : f32 to vector<16x1xf32>
    %251 = arith.addf %249, %250 : vector<16x1xf32>
    %252 = math.rsqrt %251 : vector<16x1xf32>
    %253 = vector.broadcast %252 : vector<16x1xf32> to vector<16x32xf32>
    %254 = arith.mulf %244, %253 : vector<16x32xf32>
    %255 = vector.broadcast %237 : vector<1x32xf32> to vector<16x32xf32>
    %256 = arith.mulf %254, %255 : vector<16x32xf32>
    %257 = vector.broadcast %238 : vector<1x32xf32> to vector<16x32xf32>
    %258 = arith.addf %256, %257 : vector<16x32xf32>
    %259 = arith.truncf %258 : vector<16x32xf32> to vector<16x32xbf16>
    %c288 = arith.constant 288 : index
    %c0_84 = arith.constant 0 : index
    %260 = vector.load %arg2[%c288, %c0_84] : memref<448x128xbf16, #tpu.memory_space<vmem>>, vector<32x64xbf16>
    %cst_85 = arith.constant dense<0.000000e+00> : vector<16x64xf32>
    %261 = tpu.matmul %259, %260, %cst_85 {dimension_numbers = #tpu.dot_dimension_numbers<[1], [0], [0], [1], [0, 0, 1, 1], [], []>} : vector<16x32xbf16>, vector<32x64xbf16>, vector<16x64xf32> -> vector<16x64xf32>
    %c128_86 = arith.constant 128 : index
    %c0_87 = arith.constant 0 : index
    %262 = vector.load %arg3[%c128_86, %c0_87] : memref<176x128xf32, #tpu.memory_space<vmem>>, vector<1x64xf32>
    %263 = vector.broadcast %262 : vector<1x64xf32> to vector<16x64xf32>
    %264 = arith.addf %261, %263 : vector<16x64xf32>
    %265 = arith.mulf %264, %264 : vector<16x64xf32>
    %266 = arith.mulf %264, %265 : vector<16x64xf32>
    %cst_88 = arith.constant 4.471500e-02 : f32
    %267 = vector.broadcast %cst_88 : f32 to vector<16x64xf32>
    %268 = arith.mulf %267, %266 : vector<16x64xf32>
    %269 = arith.addf %264, %268 : vector<16x64xf32>
    %cst_89 = arith.constant 0.797884583 : f32
    %270 = vector.broadcast %cst_89 : f32 to vector<16x64xf32>
    %271 = arith.mulf %270, %269 : vector<16x64xf32>
    %272 = math.tanh %271 : vector<16x64xf32>
    %cst_90 = arith.constant 1.000000e+00 : f32
    %273 = vector.broadcast %cst_90 : f32 to vector<16x64xf32>
    %274 = arith.addf %273, %272 : vector<16x64xf32>
    %cst_91 = arith.constant 5.000000e-01 : f32
    %275 = vector.broadcast %cst_91 : f32 to vector<16x64xf32>
    %276 = arith.mulf %275, %274 : vector<16x64xf32>
    %277 = arith.mulf %264, %276 : vector<16x64xf32>
    %278 = arith.truncf %277 : vector<16x64xf32> to vector<16x64xbf16>
    %c320 = arith.constant 320 : index
    %c0_92 = arith.constant 0 : index
    %279 = vector.load %arg2[%c320, %c0_92] : memref<448x128xbf16, #tpu.memory_space<vmem>>, vector<64x32xbf16>
    %cst_93 = arith.constant dense<0.000000e+00> : vector<16x32xf32>
    %280 = tpu.matmul %278, %279, %cst_93 {dimension_numbers = #tpu.dot_dimension_numbers<[1], [0], [0], [1], [0, 0, 1, 1], [], []>} : vector<16x64xbf16>, vector<64x32xbf16>, vector<16x32xf32> -> vector<16x32xf32>
    %c136 = arith.constant 136 : index
    %c0_94 = arith.constant 0 : index
    %281 = vector.load %arg3[%c136, %c0_94] : memref<176x128xf32, #tpu.memory_space<vmem>>, vector<1x32xf32>
    %282 = vector.broadcast %281 : vector<1x32xf32> to vector<16x32xf32>
    %283 = arith.addf %280, %282 : vector<16x32xf32>
    %284 = arith.addf %283, %258 : vector<16x32xf32>
    %c144 = arith.constant 144 : index
    %c0_95 = arith.constant 0 : index
    %285 = vector.load %arg3[%c144, %c0_95] : memref<176x128xf32, #tpu.memory_space<vmem>>, vector<1x32xf32>
    %c152 = arith.constant 152 : index
    %c0_96 = arith.constant 0 : index
    %286 = vector.load %arg3[%c152, %c0_96] : memref<176x128xf32, #tpu.memory_space<vmem>>, vector<1x32xf32>
    %cst_97 = arith.constant dense<0.000000e+00> : vector<16xf32>
    %287 = vector.multi_reduction <add>, %284, %cst_97 [1] : vector<16x32xf32> to vector<16xf32>
    %288 = vector.shape_cast %287 : vector<16xf32> to vector<16x1xf32>
    %cst_98 = arith.constant 3.200000e+01 : f32
    %289 = vector.broadcast %cst_98 : f32 to vector<16x1xf32>
    %290 = arith.divf %288, %289 : vector<16x1xf32>
    %291 = vector.broadcast %290 : vector<16x1xf32> to vector<16x32xf32>
    %292 = arith.subf %284, %291 : vector<16x32xf32>
    %293 = arith.mulf %292, %292 : vector<16x32xf32>
    %cst_99 = arith.constant dense<0.000000e+00> : vector<16xf32>
    %294 = vector.multi_reduction <add>, %293, %cst_99 [1] : vector<16x32xf32> to vector<16xf32>
    %295 = vector.shape_cast %294 : vector<16xf32> to vector<16x1xf32>
    %cst_100 = arith.constant 3.200000e+01 : f32
    %296 = vector.broadcast %cst_100 : f32 to vector<16x1xf32>
    %297 = arith.divf %295, %296 : vector<16x1xf32>
    %cst_101 = arith.constant 9.99999996E-13 : f32
    %298 = vector.broadcast %cst_101 : f32 to vector<16x1xf32>
    %299 = arith.addf %297, %298 : vector<16x1xf32>
    %300 = math.rsqrt %299 : vector<16x1xf32>
    %301 = vector.broadcast %300 : vector<16x1xf32> to vector<16x32xf32>
    %302 = arith.mulf %292, %301 : vector<16x32xf32>
    %303 = vector.broadcast %285 : vector<1x32xf32> to vector<16x32xf32>
    %304 = arith.mulf %302, %303 : vector<16x32xf32>
    %305 = vector.broadcast %286 : vector<1x32xf32> to vector<16x32xf32>
    %306 = arith.addf %304, %305 : vector<16x32xf32>
    %307 = vector.shape_cast %306 : vector<16x32xf32> to vector<2x8x32xf32>
    %308 = vector.extract_strided_slice %307 {offsets = [0, 0, 0], sizes = [2, 1, 32], strides = [1, 1, 1]} : vector<2x8x32xf32> to vector<2x1x32xf32>
    %309 = vector.shape_cast %308 : vector<2x1x32xf32> to vector<2x32xf32>
    %310 = arith.truncf %309 : vector<2x32xf32> to vector<2x32xbf16>
    %c384 = arith.constant 384 : index
    %c0_102 = arith.constant 0 : index
    %311 = vector.load %arg2[%c384, %c0_102] : memref<448x128xbf16, #tpu.memory_space<vmem>>, vector<32x32xbf16>
    %cst_103 = arith.constant dense<0.000000e+00> : vector<2x32xf32>
    %312 = tpu.matmul %310, %311, %cst_103 {dimension_numbers = #tpu.dot_dimension_numbers<[1], [0], [0], [1], [0, 0, 1, 1], [], []>} : vector<2x32xbf16>, vector<32x32xbf16>, vector<2x32xf32> -> vector<2x32xf32>
    %c160_104 = arith.constant 160 : index
    %c0_105 = arith.constant 0 : index
    %313 = vector.load %arg3[%c160_104, %c0_105] : memref<176x128xf32, #tpu.memory_space<vmem>>, vector<1x32xf32>
    %314 = vector.broadcast %313 : vector<1x32xf32> to vector<2x32xf32>
    %315 = arith.addf %312, %314 : vector<2x32xf32>
    %316 = math.tanh %315 : vector<2x32xf32>
    %317 = arith.truncf %316 : vector<2x32xf32> to vector<2x32xbf16>
    %c416 = arith.constant 416 : index
    %c0_106 = arith.constant 0 : index
    %318 = vector.load %arg2[%c416, %c0_106] : memref<448x128xbf16, #tpu.memory_space<vmem>>, vector<32x128xbf16>
    %cst_107 = arith.constant dense<0.000000e+00> : vector<2x128xf32>
    %319 = tpu.matmul %317, %318, %cst_107 {dimension_numbers = #tpu.dot_dimension_numbers<[1], [0], [0], [1], [0, 0, 1, 1], [], []>} : vector<2x32xbf16>, vector<32x128xbf16>, vector<2x128xf32> -> vector<2x128xf32>
    %c168 = arith.constant 168 : index
    %c0_108 = arith.constant 0 : index
    %320 = vector.load %arg3[%c168, %c0_108] : memref<176x128xf32, #tpu.memory_space<vmem>>, vector<1x128xf32>
    %321 = vector.broadcast %320 : vector<1x128xf32> to vector<2x128xf32>
    %322 = arith.addf %319, %321 : vector<2x128xf32>
    %cst_109 = arith.constant 0.000000e+00 : f32
    %323 = vector.broadcast %cst_109 : f32 to vector<2x128xf32>
    %324 = arith.maximumf %322, %323 : vector<2x128xf32>
    %c0_110 = arith.constant 0 : index
    %c0_111 = arith.constant 0 : index
    %325 = vector.load %arg4[%c0_110, %c0_111] : memref<2x128xf32, #tpu.memory_space<vmem>>, vector<2x128xf32>
    tpu.vector_store %arg4[%c0_110, %c0_111], %324 {strides = array<i32>} : memref<2x128xf32, #tpu.memory_space<vmem>>, vector<2x128xf32>,
    return
  }
}

</mosaic_0001>

<llo_original>
// kernel: bert_classifier_forward.1
$region0: #{bert_classifier_forward.1}
  #allocation0 [shape = 'u32[]', space=smem, size = 0x4, offset = 0x4, fixed_abs, tag = 'smem constant byte address 0x4 - core index']
  #allocation1 [shape = 'u32[144,128]{1,0:T(1,128)}', space=vmem, size = 0x12000, scoped, tag = 'internal scratch']
  %s0 = inlined_call_operand.vmem [shape: s32[16,1], index: 0, kind: input, shape index: {}]
  %s1 = inlined_call_operand.vmem [shape: f32[2,8], index: 1, kind: input, shape index: {}]
  %s2 = inlined_call_operand.hbm [shape: bf16[448,128], index: 2, kind: input, shape index: {}]
  %s3 = inlined_call_operand.hbm [shape: f32[176,128], index: 3, kind: input, shape index: {}]
  %s4 = inlined_call_operand.hbm [shape: f32[2,128], index: 4, kind: output, shape index: {}]
  %s5 = sld [smem:[#allocation0]]
  $region34: #{bert_classifier_forward.1} parent=0
    _
  %s7 = ssub.s32 1, %s5
  %s8 = scalar_select 0, %s7, %s5
  $region1: #{bert_classifier_forward.1} parent=0
    #allocation2 [shape = 'u8[114688]{0}', space=vmem, size = 0x1c000, scoped, tag = 'input window, operand 2, single buffered']
    #allocation3 [shape = 's32[1]{0}', space=sflag, size = 0x4, scoped, tag = 'scoped memory for bert_classifier_forward.1']
    #allocation4 [shape = 's32[1]{0}', space=sflag, size = 0x4, scoped, tag = 'scoped memory for bert_classifier_forward.1']
    #allocation5 [shape = 'u8[90112]{0}', space=vmem, size = 0x16000, scoped, tag = 'input window, operand 3, single buffered']
    #allocation6 [shape = 's32[1]{0}', space=sflag, size = 0x4, scoped, tag = 'scoped memory for bert_classifier_forward.1']
    #allocation7 [shape = 'u8[1024]{0}', space=vmem, size = 0x400, scoped, tag = 'output window, operand 0, single buffered']
    %9 = vsyncpa [#allocation3], 0
    %10 = vsyncpa [#allocation6], 0
    %11 = vsyncpa [#allocation4], 0
    // Predicated region
    $region2: #{bert_classifier_forward.1} parent=1 // pred_check
      _
    $region3: #{bert_classifier_forward.1} parent=1 // pred_check_branch
      %13 = sbr.rel (0) target = $region5
    $region4: #{bert_classifier_forward.1} parent=1 // pred_region
      _
    $region5: #{bert_classifier_forward.1} parent=1 // pred_fallthru
      _
    // Predicated region
    $region6: #{bert_classifier_forward.1} parent=1 // pred_check
      _
    $region7: #{bert_classifier_forward.1} parent=1 // pred_check_branch
      %15 = sbr.rel (0) target = $region9
    $region8: #{bert_classifier_forward.1} parent=1 // pred_region
      _
    $region9: #{bert_classifier_forward.1} parent=1 // pred_fallthru
      _
    // Predicated region
    $region10: #{bert_classifier_forward.1} parent=1 // pred_check
      _
    $region11: #{bert_classifier_forward.1} parent=1 // pred_check_branch
      %17 = sbr.rel (0) target = $region13
    $region12: #{bert_classifier_forward.1} parent=1 // pred_region
      %s19 = ssub.s32 3584, 3584
      %20 = vsyncadd [#allocation3], %s19
      %s21 = sshll.u32 [#allocation2], 4
      %s22 = int_to_ptr.vmem [resolvable:$true] %s21
      %27 = dma.hbm_to_vmem [thread:$0]  %s2, 3584, %s22, [#allocation3], 64, 64, 4
    $region13: #{bert_classifier_forward.1} parent=1 // pred_fallthru
      _
    // Predicated region
    $region14: #{bert_classifier_forward.1} parent=1 // pred_check
      _
    $region15: #{bert_classifier_forward.1} parent=1 // pred_check_branch
      %29 = sbr.rel (0) target = $region17
    $region16: #{bert_classifier_forward.1} parent=1 // pred_region
      %s31 = ssub.s32 2816, 2816
      %32 = vsyncadd [#allocation6], %s31
      %s33 = sshll.u32 [#allocation5], 4
      %s34 = int_to_ptr.vmem [resolvable:$true] %s33
      %39 = dma.hbm_to_vmem [thread:$0]  %s3, 2816, %s34, [#allocation6], 128, 128, 8
    $region17: #{bert_classifier_forward.1} parent=1 // pred_fallthru
      _
    // Predicated region
    $region18: #{bert_classifier_forward.1} parent=1 // pred_check
      _
    $region19: #{bert_classifier_forward.1} parent=1 // pred_check_branch
      %41 = sbr.rel (0) target = $region21
    $region20: #{bert_classifier_forward.1} parent=1 // pred_region
      %42 = dma.done [#allocation3], 3584
    $region21: #{bert_classifier_forward.1} parent=1 // pred_fallthru
      _
    // Predicated region
    $region22: #{bert_classifier_forward.1} parent=1 // pred_check
      _
    $region23: #{bert_classifier_forward.1} parent=1 // pred_check_branch
      %44 = sbr.rel (0) target = $region25
    $region24: #{bert_classifier_forward.1} parent=1 // pred_region
      %45 = dma.done [#allocation6], 2816
    $region25: #{bert_classifier_forward.1} parent=1 // pred_fallthru
      _
    %v47 = vld [vmem:[%s0] sm:$0xff]
    %v48 = vld [vmem:[%s0 + $0x8] sm:$0xff]
    %v49 = vlaneseq
    %v50 = vand.u32 %v49, 127
    %51 = vset.pattern.permute.xlu0 0
    %52 = vperm.xlu0 %51, %v47
    %v53 = vpop.permute.xlu0 %52
    %54 = vset.pattern.permute.xlu0 0
    %55 = vperm.xlu0 %54, %v48
    %v56 = vpop.permute.xlu0 %55
    %vm57 = vcmp.eq.s32.totalorder %v53, %v50
    %vm58 = vcmp.eq.s32.totalorder %v56, %v50
    %v59 = vsel %vm57, 1, 0
    %v60 = vsel %vm58, 1, 0
    %v61 = vcvt.s32.f32 %v59
    %v62 = vcvt.s32.f32 %v60
    %v63 = vpack.c.bf16 %v62, %v61
    %v64 = vld [vmem:[#allocation2] sm:$0xf]
    %v65 = vld [vmem:[#allocation2 + $0x4] sm:$0xf]
    %v66 = vld [vmem:[#allocation2 + $0x8] sm:$0xf]
    %v67 = vld [vmem:[#allocation2 + $0xc] sm:$0xf]
    %v68 = vld [vmem:[#allocation2 + $0x10] sm:$0xf]
    %v69 = vld [vmem:[#allocation2 + $0x14] sm:$0xf]
    %v70 = vld [vmem:[#allocation2 + $0x18] sm:$0xf]
    %v71 = vld [vmem:[#allocation2 + $0x1c] sm:$0xf]
    %v72 = vld [vmem:[#allocation5] sm:$0xff]
    %v73 = vld [vmem:[#allocation5 + $0x8] sm:$0xff]
    %v82 = vunpack.c.l.b16 %v64
    %v83 = vunpack.c.l.b16 %v65
    %v84 = vunpack.c.l.b16 %v66
    %v85 = vunpack.c.l.b16 %v67
    %v86 = vunpack.c.l.b16 %v68
    %v87 = vunpack.c.l.b16 %v69
    %v88 = vunpack.c.l.b16 %v70
    %v89 = vunpack.c.l.b16 %v71
    %v90 = vpack.c.b16 %v83, %v82
    %v91 = vpack.c.b16 %v85, %v84
    %v92 = vpack.c.b16 %v87, %v86
    %v93 = vpack.c.b16 %v89, %v88
    %vm98 = vcmask 523264
    %v100 = vsel %vm98, %v63, 0
    %102 = vmatprep.subr.bf16.mxu0 0
    %103 = vmatpush1.bf16.msra.mxu0 %v90
    %104 = vmatprep.subr.bf16.mxu0 0
    %105 = vmatpush1.bf16.msra.mxu0 %v91
    %106 = vmatprep.subr.bf16.mxu0 0
    %107 = vmatpush1.bf16.msra.mxu0 %v92
    %108 = vmatprep.subr.bf16.mxu0 0
    %109 = vmatpush1.bf16.msra.mxu0 %v93
    %110 = vmatprep.subr.bf16.mxu0 0
    %111 = vmatpush1.bf16.msra.mxu0 0
    %112 = vmatprep.subr.bf16.mxu0 0
    %113 = vmatpush1.bf16.msra.mxu0 0
    %114 = vmatprep.subr.bf16.mxu0 0
    %115 = vmatpush1.bf16.msra.mxu0 0
    %116 = vmatprep.subr.bf16.mxu0 0
    %117 = vmatpush1.bf16.msra.mxu0 0
    %118 = vmatprep.subr.bf16.mxu0 0
    %119 = vmatpush1.bf16.msra.mxu0 0
    %120 = vmatprep.subr.bf16.mxu0 0
    %121 = vmatpush1.bf16.msra.mxu0 0
    %122 = vmatprep.subr.bf16.mxu0 0
    %123 = vmatpush1.bf16.msra.mxu0 0
    %124 = vmatprep.subr.bf16.mxu0 0
    %125 = vmatpush1.bf16.msra.mxu0 0
    %126 = vmatprep.subr.bf16.mxu0 0
    %127 = vmatpush1.bf16.msra.mxu0 0
    %128 = vmatprep.subr.bf16.mxu0 0
    %129 = vmatpush1.bf16.msra.mxu0 0
    %130 = vmatprep.subr.bf16.mxu0 0
    %131 = vmatpush1.bf16.msra.mxu0 0
    %132 = vmatprep.subr.bf16.mxu0 0
    %133 = vmatpush1.bf16.msra.mxu0 0
    %134 = vmatprep.mubr.bf16.mxu0 0
    %135 = vmatmul.mubr.bf16.gmra.mrb[0].mxu0 %v100
    %v136 = vpop.f32.mrb[0].mxu0
    %v137 = vadd.f32 %v72, %v136
    %v138 = vpop.f32.mrb[0].mxu0
    %v139 = vpop.f32.mrb[0].mxu0
    %v140 = vadd.f32 %v73, %v139
    %v141 = vpop.f32.mrb[0].mxu0
    %142 = vdwg.mxu0
    %v143 = vld [vmem:[#allocation5 + $0x10] sm:$0x1]
    %v144 = vld [vmem:[#allocation5 + $0x18] sm:$0x1]
    %vm145 = vcmask 261120
    %v146 = vsel %vm145, %v137, 0.0
    %147 = vadd.xlane.f32.xlu0 %v146
    %v148 = vpop.xlane.xlu0 %147
    %v149 = vsel %vm145, %v140, 0.0
    %150 = vadd.xlane.f32.xlu0 %v149
    %v151 = vpop.xlane.xlu0 %150
    %v152 = vrcp.pop 32.0
    %v153 = vmul.f32 %v148, %v152
    %v154 = vmul.f32 %v151, %v152
    %v155 = vsub.f32 %v137, %v153
    %v156 = vsub.f32 %v140, %v154
    %v157 = vmul.f32 %v155, %v155
    %v158 = vmul.f32 %v156, %v156
    %v159 = vsel %vm145, %v157, 0.0
    %160 = vadd.xlane.f32.xlu0 %v159
    %v161 = vpop.xlane.xlu0 %160
    %v162 = vsel %vm145, %v158, 0.0
    %163 = vadd.xlane.f32.xlu0 %v162
    %v164 = vpop.xlane.xlu0 %163
    %v165 = vmul.f32 %v161, %v152
    %v166 = vmul.f32 %v164, %v152
    %v167 = vadd.f32 %v165, 1e-12
    %v168 = vadd.f32 %v166, 1e-12
    %v169 = vrsqrt.pop %v167
    %v170 = vrsqrt.pop %v168
    %v171 = vmul.f32 %v155, %v169
    %v172 = vmul.f32 %v156, %v170
    %v173 = vlaneseq
    %v174 = vshrl.u32 %v173, 7
    %v175 = vsub.s32 0, %v174
    %v176 = vrot.slane %v143, %v175
    %v177 = vmul.f32 %v171, %v176
    %v178 = vmul.f32 %v172, %v176
    %v179 = vlaneseq
    %v180 = vshrl.u32 %v179, 7
    %v181 = vsub.s32 0, %v180
    %v182 = vrot.slane %v144, %v181
    %v183 = vadd.f32 %v177, %v182
    %v184 = vadd.f32 %v178, %v182
    %v185 = vld [vmem:[%s1] sm:$0x3]
    %v186 = vsub.f32 1.0, %v185
    %v187 = vmul.f32 %v186, -10000.0
    %v190 = vunpack.c.l.s4 1966171168
    %v191 = vunpack.c.0.s8 %v190
    %v192 = vlaneseq
    %v193 = vshrl.u32 %v192, 7
    %v194 = vsub.s32 %v191, %v193
    %v195 = vrot.slane %v187, %v194
    %v196 = vcombine.high %v195, %v195
    %v198 = vunpack.c.l.s4 1966171168
    %v199 = vunpack.c.0.s8 %v198
    %v200 = vlaneseq
    %v201 = vshrl.u32 %v200, 7
    %v202 = vsub.s32 %v199, %v201
    %v203 = vrot.slane %v195, %v202
    %v205 = vunpack.c.l.s4 1966171168
    %v206 = vunpack.c.0.s8 %v205
    %v207 = vlaneseq
    %v208 = vshrl.u32 %v207, 7
    %v209 = vsub.s32 %v206, %v208
    %v210 = vrot.slane %v196, %v209
    %v211 = vpack.c.bf16 %v184, %v183
    %v212 = vld [vmem:[#allocation2 + $0x20] sm:$0xf]
    %v213 = vld [vmem:[#allocation2 + $0x24] sm:$0xf]
    %v214 = vld [vmem:[#allocation2 + $0x28] sm:$0xf]
    %v215 = vld [vmem:[#allocation2 + $0x2c] sm:$0xf]
    %v216 = vld [vmem:[#allocation5 + $0x20] sm:$0x1]
    %v217 = vlaneseq
    %v218 = vshrl.u32 %v217, 7
    %v219 = vsub.s32 0, %v218
    %v220 = vrot.slane %v216, %v219
    %v225 = vunpack.c.l.b16 %v212
    %v226 = vunpack.c.l.b16 %v213
    %v227 = vunpack.c.l.b16 %v214
    %v228 = vunpack.c.l.b16 %v215
    %v229 = vpack.c.b16 %v226, %v225
    %v230 = vpack.c.b16 %v228, %v227
    %v234 = vsel %vm145, %v211, 0
    %236 = vmatprep.subr.bf16.mxu0 0
    %237 = vmatpush1.bf16.msra.mxu0 %v229
    %238 = vmatprep.subr.bf16.mxu0 0
    %239 = vmatpush1.bf16.msra.mxu0 %v230
    %240 = vmatprep.subr.bf16.mxu0 0
    %241 = vmatpush1.bf16.msra.mxu0 0
    %242 = vmatprep.subr.bf16.mxu0 0
    %243 = vmatpush1.bf16.msra.mxu0 0
    %244 = vmatprep.subr.bf16.mxu0 0
    %245 = vmatpush1.bf16.msra.mxu0 0
    %246 = vmatprep.subr.bf16.mxu0 0
    %247 = vmatpush1.bf16.msra.mxu0 0
    %248 = vmatprep.subr.bf16.mxu0 0
    %249 = vmatpush1.bf16.msra.mxu0 0
    %250 = vmatprep.subr.bf16.mxu0 0
    %251 = vmatpush1.bf16.msra.mxu0 0
    %252 = vmatprep.subr.bf16.mxu0 0
    %253 = vmatpush1.bf16.msra.mxu0 0
    %254 = vmatprep.subr.bf16.mxu0 0
    %255 = vmatpush1.bf16.msra.mxu0 0
    %256 = vmatprep.subr.bf16.mxu0 0
    %257 = vmatpush1.bf16.msra.mxu0 0
    %258 = vmatprep.subr.bf16.mxu0 0
    %259 = vmatpush1.bf16.msra.mxu0 0
    %260 = vmatprep.subr.bf16.mxu0 0
    %261 = vmatpush1.bf16.msra.mxu0 0
    %262 = vmatprep.subr.bf16.mxu0 0
    %263 = vmatpush1.bf16.msra.mxu0 0
    %264 = vmatprep.subr.bf16.mxu0 0
    %265 = vmatpush1.bf16.msra.mxu0 0
    %266 = vmatprep.subr.bf16.mxu0 0
    %267 = vmatpush1.bf16.msra.mxu0 0
    %268 = vmatprep.mubr.bf16.mxu0 0
    %269 = vmatmul.mubr.bf16.gmra.mrb[0].mxu0 %v234
    %v270 = vpop.f32.mrb[0].mxu0
    %v271 = vadd.f32 %v220, %v270
    %v272 = vpop.f32.mrb[0].mxu0
    %v273 = vpop.f32.mrb[0].mxu0
    %v274 = vadd.f32 %v220, %v273
    %v275 = vpop.f32.mrb[0].mxu0
    %276 = vdwg.mxu0
    %v277 = vpack.c.bf16 %v271, %v271
    %v278 = vpack.c.bf16 %v274, %v274
    %v279 = vlaneseq
    %v280 = vshrl.u32 %v279, 7
    %v281 = vsub.s32 0, %v280
    %v282 = vrot.slane %v203, %v281
    %v283 = vlaneseq
    %v284 = vshrl.u32 %v283, 7
    %v285 = vsub.s32 0, %v284
    %v286 = vrot.slane %v210, %v285
    %290 = vrot.lane.b32.xlu0 %v277, 96
    %v291 = vpop.permute.xlu0 %290
    %vm292 = vcmask 130048
    %v294 = vsel %vm292, %v277, 0
    %v297 = vsel %vm292, %v291, 0
    %299 = vmatprep.subr.bf16.mxu0 0
    %300 = vmatpush1.bf16.xpose.msra.mxu0 %v297
    %301 = vmatprep.subr.bf16.mxu0 0
    %302 = vmatpush1.bf16.xpose.msra.mxu0 0
    %303 = vmatprep.subr.bf16.mxu0 0
    %304 = vmatpush1.bf16.xpose.msra.mxu0 0
    %305 = vmatprep.subr.bf16.mxu0 0
    %306 = vmatpush1.bf16.xpose.msra.mxu0 0
    %307 = vmatprep.subr.bf16.mxu0 0
    %308 = vmatpush1.bf16.xpose.msra.mxu0 0
    %309 = vmatprep.subr.bf16.mxu0 0
    %310 = vmatpush1.bf16.xpose.msra.mxu0 0
    %311 = vmatprep.subr.bf16.mxu0 0
    %312 = vmatpush1.bf16.xpose.msra.mxu0 0
    %313 = vmatprep.subr.bf16.mxu0 0
    %314 = vmatpush1.bf16.xpose.msra.mxu0 0
    %315 = vmatprep.subr.bf16.mxu0 0
    %316 = vmatpush1.bf16.xpose.msra.mxu0 0
    %317 = vmatprep.subr.bf16.mxu0 0
    %318 = vmatpush1.bf16.xpose.msra.mxu0 0
    %319 = vmatprep.subr.bf16.mxu0 0
    %320 = vmatpush1.bf16.xpose.msra.mxu0 0
    %321 = vmatprep.subr.bf16.mxu0 0
    %322 = vmatpush1.bf16.xpose.msra.mxu0 0
    %323 = vmatprep.subr.bf16.mxu0 0
    %324 = vmatpush1.bf16.xpose.msra.mxu0 0
    %325 = vmatprep.subr.bf16.mxu0 0
    %326 = vmatpush1.bf16.xpose.msra.mxu0 0
    %327 = vmatprep.subr.bf16.mxu0 0
    %328 = vmatpush1.bf16.xpose.msra.mxu0 0
    %329 = vmatprep.subr.bf16.mxu0 0
    %330 = vmatpush1.bf16.xpose.msra.mxu0 0
    %331 = vmatprep.mubr.bf16.mxu0 0
    %332 = vmatmul.mubr.bf16.gmra.mrb[0].mxu0 %v294
    %v333 = vpop.f32.mrb[0].mxu0
    %v334 = vadd.f32 %v282, %v333
    %v335 = vpop.f32.mrb[0].mxu0
    %v336 = vpop.f32.mrb[0].mxu0
    %v337 = vpop.f32.mrb[0].mxu0
    %338 = vdwg.mxu0
    %340 = vrot.lane.b32.xlu0 %v278, 96
    %v341 = vpop.permute.xlu0 %340
    %v343 = vsel %vm292, %v278, 0
    %v346 = vsel %vm292, %v341, 0
    %348 = vmatprep.subr.bf16.mxu0 0
    %349 = vmatpush1.bf16.xpose.msra.mxu0 %v346
    %350 = vmatprep.subr.bf16.mxu0 0
    %351 = vmatpush1.bf16.xpose.msra.mxu0 0
    %352 = vmatprep.subr.bf16.mxu0 0
    %353 = vmatpush1.bf16.xpose.msra.mxu0 0
    %354 = vmatprep.subr.bf16.mxu0 0
    %355 = vmatpush1.bf16.xpose.msra.mxu0 0
    %356 = vmatprep.subr.bf16.mxu0 0
    %357 = vmatpush1.bf16.xpose.msra.mxu0 0
    %358 = vmatprep.subr.bf16.mxu0 0
    %359 = vmatpush1.bf16.xpose.msra.mxu0 0
    %360 = vmatprep.subr.bf16.mxu0 0
    %361 = vmatpush1.bf16.xpose.msra.mxu0 0
    %362 = vmatprep.subr.bf16.mxu0 0
    %363 = vmatpush1.bf16.xpose.msra.mxu0 0
    %364 = vmatprep.subr.bf16.mxu0 0
    %365 = vmatpush1.bf16.xpose.msra.mxu0 0
    %366 = vmatprep.subr.bf16.mxu0 0
    %367 = vmatpush1.bf16.xpose.msra.mxu0 0
    %368 = vmatprep.subr.bf16.mxu0 0
    %369 = vmatpush1.bf16.xpose.msra.mxu0 0
    %370 = vmatprep.subr.bf16.mxu0 0
    %371 = vmatpush1.bf16.xpose.msra.mxu0 0
    %372 = vmatprep.subr.bf16.mxu0 0
    %373 = vmatpush1.bf16.xpose.msra.mxu0 0
    %374 = vmatprep.subr.bf16.mxu0 0
    %375 = vmatpush1.bf16.xpose.msra.mxu0 0
    %376 = vmatprep.subr.bf16.mxu0 0
    %377 = vmatpush1.bf16.xpose.msra.mxu0 0
    %378 = vmatprep.subr.bf16.mxu0 0
    %379 = vmatpush1.bf16.xpose.msra.mxu0 0
    %380 = vmatprep.mubr.bf16.mxu0 0
    %381 = vmatmul.mubr.bf16.gmra.mrb[0].mxu0 %v343
    %v382 = vpop.f32.mrb[0].mxu0
    %v383 = vadd.f32 %v286, %v382
    %v384 = vpop.f32.mrb[0].mxu0
    %v385 = vpop.f32.mrb[0].mxu0
    %v386 = vpop.f32.mrb[0].mxu0
    %387 = vdwg.mxu0
    %vm388 = vcmask 64512
    %v389 = vsel %vm388, %v334, -inf
    %390 = vmax.xlane.f32.xlu0 %v389
    %v391 = vpop.xlane.xlu0 %390
    %v392 = vsel %vm388, %v383, -inf
    %393 = vmax.xlane.f32.xlu0 %v392
    %v394 = vpop.xlane.xlu0 %393
    %v395 = vsub.f32 %v334, %v391
    %v396 = vsub.f32 %v383, %v394
    %v397 = vmul.f32 %v395, 1.442695
    %v398 = vpow.pop %v397
    %v399 = vmul.f32 %v396, 1.442695
    %v400 = vpow.pop %v399
    %v401 = vsel %vm388, %v398, 0.0
    %402 = vadd.xlane.f32.xlu0 %v401
    %v403 = vpop.xlane.xlu0 %402
    %v404 = vsel %vm388, %v400, 0.0
    %405 = vadd.xlane.f32.xlu0 %v404
    %v406 = vpop.xlane.xlu0 %405
    %v407 = vrcp.pop %v403
    %v408 = vrcp.pop %v406
    %v409 = vmul.f32 %v398, %v407
    %v410 = vmul.f32 %v400, %v408
    %v411 = vpack.c.bf16 %v409, %v409
    %v412 = vpack.c.bf16 %v410, %v410
    %413 = vrot.lane.b32.xlu0 %v277, 64
    %v414 = vpop.permute.xlu0 %413
    %v416 = vsel %vm388, %v411, 0
    %vm418 = vcmask 1043456
    %v420 = vsel %vm418, %v414, 0
    %422 = vmatprep.subr.bf16.mxu0 0
    %423 = vmatpush1.bf16.msra.mxu0 %v420
    %424 = vmatprep.subr.bf16.mxu0 0
    %425 = vmatpush1.bf16.msra.mxu0 0
    %426 = vmatprep.subr.bf16.mxu0 0
    %427 = vmatpush1.bf16.msra.mxu0 0
    %428 = vmatprep.subr.bf16.mxu0 0
    %429 = vmatpush1.bf16.msra.mxu0 0
    %430 = vmatprep.subr.bf16.mxu0 0
    %431 = vmatpush1.bf16.msra.mxu0 0
    %432 = vmatprep.subr.bf16.mxu0 0
    %433 = vmatpush1.bf16.msra.mxu0 0
    %434 = vmatprep.subr.bf16.mxu0 0
    %435 = vmatpush1.bf16.msra.mxu0 0
    %436 = vmatprep.subr.bf16.mxu0 0
    %437 = vmatpush1.bf16.msra.mxu0 0
    %438 = vmatprep.subr.bf16.mxu0 0
    %439 = vmatpush1.bf16.msra.mxu0 0
    %440 = vmatprep.subr.bf16.mxu0 0
    %441 = vmatpush1.bf16.msra.mxu0 0
    %442 = vmatprep.subr.bf16.mxu0 0
    %443 = vmatpush1.bf16.msra.mxu0 0
    %444 = vmatprep.subr.bf16.mxu0 0
    %445 = vmatpush1.bf16.msra.mxu0 0
    %446 = vmatprep.subr.bf16.mxu0 0
    %447 = vmatpush1.bf16.msra.mxu0 0
    %448 = vmatprep.subr.bf16.mxu0 0
    %449 = vmatpush1.bf16.msra.mxu0 0
    %450 = vmatprep.subr.bf16.mxu0 0
    %451 = vmatpush1.bf16.msra.mxu0 0
    %452 = vmatprep.subr.bf16.mxu0 0
    %453 = vmatpush1.bf16.msra.mxu0 0
    %454 = vmatprep.mubr.bf16.mxu0 0
    %455 = vmatmul.mubr.bf16.gmra.mrb[0].mxu0 %v416
    %v456 = vpop.f32.mrb[0].mxu0
    %v457 = vadd.f32 0.0, %v456
    %v458 = vpop.f32.mrb[0].mxu0
    %v459 = vpop.f32.mrb[0].mxu0
    %v460 = vpop.f32.mrb[0].mxu0
    %461 = vdwg.mxu0
    %462 = vrot.lane.b32.xlu0 %v278, 64
    %v463 = vpop.permute.xlu0 %462
    %v465 = vsel %vm388, %v412, 0
    %v468 = vsel %vm418, %v463, 0
    %470 = vmatprep.subr.bf16.mxu0 0
    %471 = vmatpush1.bf16.msra.mxu0 %v468
    %472 = vmatprep.subr.bf16.mxu0 0
    %473 = vmatpush1.bf16.msra.mxu0 0
    %474 = vmatprep.subr.bf16.mxu0 0
    %475 = vmatpush1.bf16.msra.mxu0 0
    %476 = vmatprep.subr.bf16.mxu0 0
    %477 = vmatpush1.bf16.msra.mxu0 0
    %478 = vmatprep.subr.bf16.mxu0 0
    %479 = vmatpush1.bf16.msra.mxu0 0
    %480 = vmatprep.subr.bf16.mxu0 0
    %481 = vmatpush1.bf16.msra.mxu0 0
    %482 = vmatprep.subr.bf16.mxu0 0
    %483 = vmatpush1.bf16.msra.mxu0 0
    %484 = vmatprep.subr.bf16.mxu0 0
    %485 = vmatpush1.bf16.msra.mxu0 0
    %486 = vmatprep.subr.bf16.mxu0 0
    %487 = vmatpush1.bf16.msra.mxu0 0
    %488 = vmatprep.subr.bf16.mxu0 0
    %489 = vmatpush1.bf16.msra.mxu0 0
    %490 = vmatprep.subr.bf16.mxu0 0
    %491 = vmatpush1.bf16.msra.mxu0 0
    %492 = vmatprep.subr.bf16.mxu0 0
    %493 = vmatpush1.bf16.msra.mxu0 0
    %494 = vmatprep.subr.bf16.mxu0 0
    %495 = vmatpush1.bf16.msra.mxu0 0
    %496 = vmatprep.subr.bf16.mxu0 0
    %497 = vmatpush1.bf16.msra.mxu0 0
    %498 = vmatprep.subr.bf16.mxu0 0
    %499 = vmatpush1.bf16.msra.mxu0 0
    %500 = vmatprep.subr.bf16.mxu0 0
    %501 = vmatpush1.bf16.msra.mxu0 0
    %502 = vmatprep.mubr.bf16.mxu0 0
    %503 = vmatmul.mubr.bf16.gmra.mrb[0].mxu0 %v465
    %v504 = vpop.f32.mrb[0].mxu0
    %v505 = vadd.f32 0.0, %v504
    %v506 = vpop.f32.mrb[0].mxu0
    %v507 = vpop.f32.mrb[0].mxu0
    %v508 = vpop.f32.mrb[0].mxu0
    %509 = vdwg.mxu0
    %v510 = vpack.c.bf16 %v505, %v457
    %v511 = vld [vmem:[#allocation2 + $0x30] sm:$0xf]
    %v512 = vld [vmem:[#allocation2 + $0x34] sm:$0xf]
    %513 = vrot.lane.b32.xlu0 %v277, 112
    %v514 = vpop.permute.xlu0 %513
    %515 = vrot.lane.b32.xlu0 %v277, 80
    %v516 = vpop.permute.xlu0 %515
    %v518 = vsel %vm292, %v514, 0
    %v521 = vsel %vm292, %v516, 0
    %523 = vmatprep.subr.bf16.mxu0 0
    %524 = vmatpush1.bf16.xpose.msra.mxu0 %v521
    %525 = vmatprep.subr.bf16.mxu0 0
    %526 = vmatpush1.bf16.xpose.msra.mxu0 0
    %527 = vmatprep.subr.bf16.mxu0 0
    %528 = vmatpush1.bf16.xpose.msra.mxu0 0
    %529 = vmatprep.subr.bf16.mxu0 0
    %530 = vmatpush1.bf16.xpose.msra.mxu0 0
    %531 = vmatprep.subr.bf16.mxu0 0
    %532 = vmatpush1.bf16.xpose.msra.mxu0 0
    %533 = vmatprep.subr.bf16.mxu0 0
    %534 = vmatpush1.bf16.xpose.msra.mxu0 0
    %535 = vmatprep.subr.bf16.mxu0 0
    %536 = vmatpush1.bf16.xpose.msra.mxu0 0
    %537 = vmatprep.subr.bf16.mxu0 0
    %538 = vmatpush1.bf16.xpose.msra.mxu0 0
    %539 = vmatprep.subr.bf16.mxu0 0
    %540 = vmatpush1.bf16.xpose.msra.mxu0 0
    %541 = vmatprep.subr.bf16.mxu0 0
    %542 = vmatpush1.bf16.xpose.msra.mxu0 0
    %543 = vmatprep.subr.bf16.mxu0 0
    %544 = vmatpush1.bf16.xpose.msra.mxu0 0
    %545 = vmatprep.subr.bf16.mxu0 0
    %546 = vmatpush1.bf16.xpose.msra.mxu0 0
    %547 = vmatprep.subr.bf16.mxu0 0
    %548 = vmatpush1.bf16.xpose.msra.mxu0 0
    %549 = vmatprep.subr.bf16.mxu0 0
    %550 = vmatpush1.bf16.xpose.msra.mxu0 0
    %551 = vmatprep.subr.bf16.mxu0 0
    %552 = vmatpush1.bf16.xpose.msra.mxu0 0
    %553 = vmatprep.subr.bf16.mxu0 0
    %554 = vmatpush1.bf16.xpose.msra.mxu0 0
    %555 = vmatprep.mubr.bf16.mxu0 0
    %556 = vmatmul.mubr.bf16.gmra.mrb[0].mxu0 %v518
    %v557 = vpop.f32.mrb[0].mxu0
    %v558 = vadd.f32 %v282, %v557
    %v559 = vpop.f32.mrb[0].mxu0
    %v560 = vpop.f32.mrb[0].mxu0
    %v561 = vpop.f32.mrb[0].mxu0
    %562 = vdwg.mxu0
    %563 = vrot.lane.b32.xlu0 %v278, 112
    %v564 = vpop.permute.xlu0 %563
    %565 = vrot.lane.b32.xlu0 %v278, 80
    %v566 = vpop.permute.xlu0 %565
    %v568 = vsel %vm292, %v564, 0
    %v571 = vsel %vm292, %v566, 0
    %573 = vmatprep.subr.bf16.mxu0 0
    %574 = vmatpush1.bf16.xpose.msra.mxu0 %v571
    %575 = vmatprep.subr.bf16.mxu0 0
    %576 = vmatpush1.bf16.xpose.msra.mxu0 0
    %577 = vmatprep.subr.bf16.mxu0 0
    %578 = vmatpush1.bf16.xpose.msra.mxu0 0
    %579 = vmatprep.subr.bf16.mxu0 0
    %580 = vmatpush1.bf16.xpose.msra.mxu0 0
    %581 = vmatprep.subr.bf16.mxu0 0
    %582 = vmatpush1.bf16.xpose.msra.mxu0 0
    %583 = vmatprep.subr.bf16.mxu0 0
    %584 = vmatpush1.bf16.xpose.msra.mxu0 0
    %585 = vmatprep.subr.bf16.mxu0 0
    %586 = vmatpush1.bf16.xpose.msra.mxu0 0
    %587 = vmatprep.subr.bf16.mxu0 0
    %588 = vmatpush1.bf16.xpose.msra.mxu0 0
    %589 = vmatprep.subr.bf16.mxu0 0
    %590 = vmatpush1.bf16.xpose.msra.mxu0 0
    %591 = vmatprep.subr.bf16.mxu0 0
    %592 = vmatpush1.bf16.xpose.msra.mxu0 0
    %593 = vmatprep.subr.bf16.mxu0 0
    %594 = vmatpush1.bf16.xpose.msra.mxu0 0
    %595 = vmatprep.subr.bf16.mxu0 0
    %596 = vmatpush1.bf16.xpose.msra.mxu0 0
    %597 = vmatprep.subr.bf16.mxu0 0
    %598 = vmatpush1.bf16.xpose.msra.mxu0 0
    %599 = vmatprep.subr.bf16.mxu0 0
    %600 = vmatpush1.bf16.xpose.msra.mxu0 0
    %601 = vmatprep.subr.bf16.mxu0 0
    %602 = vmatpush1.bf16.xpose.msra.mxu0 0
    %603 = vmatprep.subr.bf16.mxu0 0
    %604 = vmatpush1.bf16.xpose.msra.mxu0 0
    %605 = vmatprep.mubr.bf16.mxu0 0
    %606 = vmatmul.mubr.bf16.gmra.mrb[0].mxu0 %v568
    %v607 = vpop.f32.mrb[0].mxu0
    %v608 = vadd.f32 %v286, %v607
    %v609 = vpop.f32.mrb[0].mxu0
    %v610 = vpop.f32.mrb[0].mxu0
    %v611 = vpop.f32.mrb[0].mxu0
    %612 = vdwg.mxu0
    %v613 = vsel %vm388, %v558, -inf
    %614 = vmax.xlane.f32.xlu0 %v613
    %v615 = vpop.xlane.xlu0 %614
    %v616 = vsel %vm388, %v608, -inf
    %617 = vmax.xlane.f32.xlu0 %v616
    %v618 = vpop.xlane.xlu0 %617
    %v619 = vsub.f32 %v558, %v615
    %v620 = vsub.f32 %v608, %v618
    %v621 = vmul.f32 %v619, 1.442695
    %v622 = vpow.pop %v621
    %v623 = vmul.f32 %v620, 1.442695
    %v624 = vpow.pop %v623
    %v625 = vsel %vm388, %v622, 0.0
    %626 = vadd.xlane.f32.xlu0 %v625
    %v627 = vpop.xlane.xlu0 %626
    %v628 = vsel %vm388, %v624, 0.0
    %629 = vadd.xlane.f32.xlu0 %v628
    %v630 = vpop.xlane.xlu0 %629
    %v631 = vrcp.pop %v627
    %v632 = vrcp.pop %v630
    %v633 = vmul.f32 %v622, %v631
    %v634 = vmul.f32 %v624, %v632
    %v635 = vpack.c.bf16 %v633, %v633
    %v636 = vpack.c.bf16 %v634, %v634
    %637 = vrot.lane.b32.xlu0 %v277, 48
    %v638 = vpop.permute.xlu0 %637
    %v640 = vsel %vm388, %v635, 0
    %v643 = vsel %vm418, %v638, 0
    %645 = vmatprep.subr.bf16.mxu0 0
    %646 = vmatpush1.bf16.msra.mxu0 %v643
    %647 = vmatprep.subr.bf16.mxu0 0
    %648 = vmatpush1.bf16.msra.mxu0 0
    %649 = vmatprep.subr.bf16.mxu0 0
    %650 = vmatpush1.bf16.msra.mxu0 0
    %651 = vmatprep.subr.bf16.mxu0 0
    %652 = vmatpush1.bf16.msra.mxu0 0
    %653 = vmatprep.subr.bf16.mxu0 0
    %654 = vmatpush1.bf16.msra.mxu0 0
    %655 = vmatprep.subr.bf16.mxu0 0
    %656 = vmatpush1.bf16.msra.mxu0 0
    %657 = vmatprep.subr.bf16.mxu0 0
    %658 = vmatpush1.bf16.msra.mxu0 0
    %659 = vmatprep.subr.bf16.mxu0 0
    %660 = vmatpush1.bf16.msra.mxu0 0
    %661 = vmatprep.subr.bf16.mxu0 0
    %662 = vmatpush1.bf16.msra.mxu0 0
    %663 = vmatprep.subr.bf16.mxu0 0
    %664 = vmatpush1.bf16.msra.mxu0 0
    %665 = vmatprep.subr.bf16.mxu0 0
    %666 = vmatpush1.bf16.msra.mxu0 0
    %667 = vmatprep.subr.bf16.mxu0 0
    %668 = vmatpush1.bf16.msra.mxu0 0
    %669 = vmatprep.subr.bf16.mxu0 0
    %670 = vmatpush1.bf16.msra.mxu0 0
    %671 = vmatprep.subr.bf16.mxu0 0
    %672 = vmatpush1.bf16.msra.mxu0 0
    %673 = vmatprep.subr.bf16.mxu0 0
    %674 = vmatpush1.bf16.msra.mxu0 0
    %675 = vmatprep.subr.bf16.mxu0 0
    %676 = vmatpush1.bf16.msra.mxu0 0
    %677 = vmatprep.mubr.bf16.mxu0 0
    %678 = vmatmul.mubr.bf16.gmra.mrb[0].mxu0 %v640
    %v679 = vpop.f32.mrb[0].mxu0
    %v680 = vadd.f32 0.0, %v679
    %v681 = vpop.f32.mrb[0].mxu0
    %v682 = vpop.f32.mrb[0].mxu0
    %v683 = vpop.f32.mrb[0].mxu0
    %684 = vdwg.mxu0
    %685 = vrot.lane.b32.xlu0 %v278, 48
    %v686 = vpop.permute.xlu0 %685
    %v688 = vsel %vm388, %v636, 0
    %v691 = vsel %vm418, %v686, 0
    %693 = vmatprep.subr.bf16.mxu0 0
    %694 = vmatpush1.bf16.msra.mxu0 %v691
    %695 = vmatprep.subr.bf16.mxu0 0
    %696 = vmatpush1.bf16.msra.mxu0 0
    %697 = vmatprep.subr.bf16.mxu0 0
    %698 = vmatpush1.bf16.msra.mxu0 0
    %699 = vmatprep.subr.bf16.mxu0 0
    %700 = vmatpush1.bf16.msra.mxu0 0
    %701 = vmatprep.subr.bf16.mxu0 0
    %702 = vmatpush1.bf16.msra.mxu0 0
    %703 = vmatprep.subr.bf16.mxu0 0
    %704 = vmatpush1.bf16.msra.mxu0 0
    %705 = vmatprep.subr.bf16.mxu0 0
    %706 = vmatpush1.bf16.msra.mxu0 0
    %707 = vmatprep.subr.bf16.mxu0 0
    %708 = vmatpush1.bf16.msra.mxu0 0
    %709 = vmatprep.subr.bf16.mxu0 0
    %710 = vmatpush1.bf16.msra.mxu0 0
    %711 = vmatprep.subr.bf16.mxu0 0
    %712 = vmatpush1.bf16.msra.mxu0 0
    %713 = vmatprep.subr.bf16.mxu0 0
    %714 = vmatpush1.bf16.msra.mxu0 0
    %715 = vmatprep.subr.bf16.mxu0 0
    %716 = vmatpush1.bf16.msra.mxu0 0
    %717 = vmatprep.subr.bf16.mxu0 0
    %718 = vmatpush1.bf16.msra.mxu0 0
    %719 = vmatprep.subr.bf16.mxu0 0
    %720 = vmatpush1.bf16.msra.mxu0 0
    %721 = vmatprep.subr.bf16.mxu0 0
    %722 = vmatpush1.bf16.msra.mxu0 0
    %723 = vmatprep.subr.bf16.mxu0 0
    %724 = vmatpush1.bf16.msra.mxu0 0
    %725 = vmatprep.mubr.bf16.mxu0 0
    %726 = vmatmul.mubr.bf16.gmra.mrb[0].mxu0 %v688
    %v727 = vpop.f32.mrb[0].mxu0
    %v728 = vadd.f32 0.0, %v727
    %v729 = vpop.f32.mrb[0].mxu0
    %v730 = vpop.f32.mrb[0].mxu0
    %v731 = vpop.f32.mrb[0].mxu0
    %732 = vdwg.mxu0
    %v733 = vpack.c.bf16 %v728, %v680
    %v734 = vld [vmem:[#allocation2 + $0x38] sm:$0xf]
    %v735 = vld [vmem:[#allocation2 + $0x3c] sm:$0xf]
    %v738 = vunpack.c.l.b16 %v734
    %v739 = vunpack.c.l.b16 %v735
    %v740 = vpack.c.b16 %v739, %v738
    %v743 = vsel %vm292, %v733, 0
    %745 = vmatprep.subr.bf16.mxu0 0
    %746 = vmatpush1.bf16.msra.mxu0 %v740
    %747 = vmatprep.subr.bf16.mxu0 0
    %748 = vmatpush1.bf16.msra.mxu0 0
    %749 = vmatprep.subr.bf16.mxu0 0
    %750 = vmatpush1.bf16.msra.mxu0 0
    %751 = vmatprep.subr.bf16.mxu0 0
    %752 = vmatpush1.bf16.msra.mxu0 0
    %753 = vmatprep.subr.bf16.mxu0 0
    %754 = vmatpush1.bf16.msra.mxu0 0
    %755 = vmatprep.subr.bf16.mxu0 0
    %756 = vmatpush1.bf16.msra.mxu0 0
    %757 = vmatprep.subr.bf16.mxu0 0
    %758 = vmatpush1.bf16.msra.mxu0 0
    %759 = vmatprep.subr.bf16.mxu0 0
    %760 = vmatpush1.bf16.msra.mxu0 0
    %761 = vmatprep.subr.bf16.mxu0 0
    %762 = vmatpush1.bf16.msra.mxu0 0
    %763 = vmatprep.subr.bf16.mxu0 0
    %764 = vmatpush1.bf16.msra.mxu0 0
    %765 = vmatprep.subr.bf16.mxu0 0
    %766 = vmatpush1.bf16.msra.mxu0 0
    %767 = vmatprep.subr.bf16.mxu0 0
    %768 = vmatpush1.bf16.msra.mxu0 0
    %769 = vmatprep.subr.bf16.mxu0 0
    %770 = vmatpush1.bf16.msra.mxu0 0
    %771 = vmatprep.subr.bf16.mxu0 0
    %772 = vmatpush1.bf16.msra.mxu0 0
    %773 = vmatprep.subr.bf16.mxu0 0
    %774 = vmatpush1.bf16.msra.mxu0 0
    %775 = vmatprep.subr.bf16.mxu0 0
    %776 = vmatpush1.bf16.msra.mxu0 0
    %777 = vmatprep.mubr.bf16.mxu0 0
    %778 = vmatmul.mubr.bf16.gmra.mrb[0].mxu0 %v743
    %v779 = vpop.f32.mrb[0].mxu0
    %v780 = vadd.f32 0.0, %v779
    %v781 = vpop.f32.mrb[0].mxu0
    %v782 = vpop.f32.mrb[0].mxu0
    %v783 = vadd.f32 0.0, %v782
    %v784 = vpop.f32.mrb[0].mxu0
    %785 = vdwg.mxu0
    %v788 = vunpack.c.l.b16 %v511
    %v789 = vunpack.c.l.b16 %v512
    %v790 = vpack.c.b16 %v789, %v788
    %v793 = vsel %vm292, %v510, 0
    %795 = vmatprep.subr.bf16.mxu0 0
    %796 = vmatpush1.bf16.msra.mxu0 %v790
    %797 = vmatprep.subr.bf16.mxu0 0
    %798 = vmatpush1.bf16.msra.mxu0 0
    %799 = vmatprep.subr.bf16.mxu0 0
    %800 = vmatpush1.bf16.msra.mxu0 0
    %801 = vmatprep.subr.bf16.mxu0 0
    %802 = vmatpush1.bf16.msra.mxu0 0
    %803 = vmatprep.subr.bf16.mxu0 0
    %804 = vmatpush1.bf16.msra.mxu0 0
    %805 = vmatprep.subr.bf16.mxu0 0
    %806 = vmatpush1.bf16.msra.mxu0 0
    %807 = vmatprep.subr.bf16.mxu0 0
    %808 = vmatpush1.bf16.msra.mxu0 0
    %809 = vmatprep.subr.bf16.mxu0 0
    %810 = vmatpush1.bf16.msra.mxu0 0
    %811 = vmatprep.subr.bf16.mxu0 0
    %812 = vmatpush1.bf16.msra.mxu0 0
    %813 = vmatprep.subr.bf16.mxu0 0
    %814 = vmatpush1.bf16.msra.mxu0 0
    %815 = vmatprep.subr.bf16.mxu0 0
    %816 = vmatpush1.bf16.msra.mxu0 0
    %817 = vmatprep.subr.bf16.mxu0 0
    %818 = vmatpush1.bf16.msra.mxu0 0
    %819 = vmatprep.subr.bf16.mxu0 0
    %820 = vmatpush1.bf16.msra.mxu0 0
    %821 = vmatprep.subr.bf16.mxu0 0
    %822 = vmatpush1.bf16.msra.mxu0 0
    %823 = vmatprep.subr.bf16.mxu0 0
    %824 = vmatpush1.bf16.msra.mxu0 0
    %825 = vmatprep.subr.bf16.mxu0 0
    %826 = vmatpush1.bf16.msra.mxu0 0
    %827 = vmatprep.mubr.bf16.mxu0 0
    %828 = vmatmul.mubr.bf16.gmra.mrb[0].mxu0 %v793
    %v829 = vpop.f32.mrb[0].mxu0
    %v830 = vadd.f32 %v780, %v829
    %v831 = vpop.f32.mrb[0].mxu0
    %v832 = vpop.f32.mrb[0].mxu0
    %v833 = vadd.f32 %v783, %v832
    %v834 = vpop.f32.mrb[0].mxu0
    %835 = vdwg.mxu0
    %v836 = vld [vmem:[#allocation5 + $0x28] sm:$0x1]
    %v837 = vlaneseq
    %v838 = vshrl.u32 %v837, 7
    %v839 = vsub.s32 0, %v838
    %v840 = vrot.slane %v836, %v839
    %v841 = vadd.f32 %v830, %v840
    %v842 = vadd.f32 %v833, %v840
    %v843 = vadd.f32 %v841, %v183
    %v844 = vadd.f32 %v842, %v184
    %v845 = vld [vmem:[#allocation5 + $0x30] sm:$0x1]
    %v846 = vld [vmem:[#allocation5 + $0x38] sm:$0x1]
    %v847 = vsel %vm145, %v843, 0.0
    %848 = vadd.xlane.f32.xlu0 %v847
    %v849 = vpop.xlane.xlu0 %848
    %v850 = vsel %vm145, %v844, 0.0
    %851 = vadd.xlane.f32.xlu0 %v850
    %v852 = vpop.xlane.xlu0 %851
    %v853 = vmul.f32 %v849, %v152
    %v854 = vmul.f32 %v852, %v152
    %v855 = vsub.f32 %v843, %v853
    %v856 = vsub.f32 %v844, %v854
    %v857 = vmul.f32 %v855, %v855
    %v858 = vmul.f32 %v856, %v856
    %v859 = vsel %vm145, %v857, 0.0
    %860 = vadd.xlane.f32.xlu0 %v859
    %v861 = vpop.xlane.xlu0 %860
    %v862 = vsel %vm145, %v858, 0.0
    %863 = vadd.xlane.f32.xlu0 %v862
    %v864 = vpop.xlane.xlu0 %863
    %v865 = vmul.f32 %v861, %v152
    %v866 = vmul.f32 %v864, %v152
    %v867 = vadd.f32 %v865, 1e-12
    %v868 = vadd.f32 %v866, 1e-12
    %v869 = vrsqrt.pop %v867
    %v870 = vrsqrt.pop %v868
    %v871 = vmul.f32 %v855, %v869
    %v872 = vmul.f32 %v856, %v870
    %v873 = vlaneseq
    %v874 = vshrl.u32 %v873, 7
    %v875 = vsub.s32 0, %v874
    %v876 = vrot.slane %v845, %v875
    %v877 = vmul.f32 %v871, %v876
    %v878 = vmul.f32 %v872, %v876
    %v879 = vlaneseq
    %v880 = vshrl.u32 %v879, 7
    %v881 = vsub.s32 0, %v880
    %v882 = vrot.slane %v846, %v881
    %v883 = vadd.f32 %v877, %v882
    %v884 = vadd.f32 %v878, %v882
    %v885 = vpack.c.bf16 %v884, %v883
    %v886 = vld [vmem:[#allocation2 + $0x40] sm:$0xf]
    %v887 = vld [vmem:[#allocation2 + $0x44] sm:$0xf]
    %v888 = vld [vmem:[#allocation2 + $0x48] sm:$0xf]
    %v889 = vld [vmem:[#allocation2 + $0x4c] sm:$0xf]
    %v890 = vld [vmem:[#allocation5 + $0x40] sm:$0x1]
    %v891 = vlaneseq
    %v892 = vshrl.u32 %v891, 7
    %v893 = vsub.s32 0, %v892
    %v894 = vrot.slane %v890, %v893
    %v899 = vunpack.c.l.b16 %v886
    %v900 = vunpack.c.l.b16 %v887
    %v901 = vunpack.c.l.b16 %v888
    %v902 = vunpack.c.l.b16 %v889
    %v903 = vpack.c.b16 %v900, %v899
    %v904 = vpack.c.b16 %v902, %v901
    %v908 = vsel %vm145, %v885, 0
    %910 = vmatprep.subr.bf16.mxu0 0
    %911 = vmatpush1.bf16.msra.mxu0 %v903
    %912 = vmatprep.subr.bf16.mxu0 0
    %913 = vmatpush1.bf16.msra.mxu0 %v904
    %914 = vmatprep.subr.bf16.mxu0 0
    %915 = vmatpush1.bf16.msra.mxu0 0
    %916 = vmatprep.subr.bf16.mxu0 0
    %917 = vmatpush1.bf16.msra.mxu0 0
    %918 = vmatprep.subr.bf16.mxu0 0
    %919 = vmatpush1.bf16.msra.mxu0 0
    %920 = vmatprep.subr.bf16.mxu0 0
    %921 = vmatpush1.bf16.msra.mxu0 0
    %922 = vmatprep.subr.bf16.mxu0 0
    %923 = vmatpush1.bf16.msra.mxu0 0
    %924 = vmatprep.subr.bf16.mxu0 0
    %925 = vmatpush1.bf16.msra.mxu0 0
    %926 = vmatprep.subr.bf16.mxu0 0
    %927 = vmatpush1.bf16.msra.mxu0 0
    %928 = vmatprep.subr.bf16.mxu0 0
    %929 = vmatpush1.bf16.msra.mxu0 0
    %930 = vmatprep.subr.bf16.mxu0 0
    %931 = vmatpush1.bf16.msra.mxu0 0
    %932 = vmatprep.subr.bf16.mxu0 0
    %933 = vmatpush1.bf16.msra.mxu0 0
    %934 = vmatprep.subr.bf16.mxu0 0
    %935 = vmatpush1.bf16.msra.mxu0 0
    %936 = vmatprep.subr.bf16.mxu0 0
    %937 = vmatpush1.bf16.msra.mxu0 0
    %938 = vmatprep.subr.bf16.mxu0 0
    %939 = vmatpush1.bf16.msra.mxu0 0
    %940 = vmatprep.subr.bf16.mxu0 0
    %941 = vmatpush1.bf16.msra.mxu0 0
    %942 = vmatprep.mubr.bf16.mxu0 0
    %943 = vmatmul.mubr.bf16.gmra.mrb[0].mxu0 %v908
    %v944 = vpop.f32.mrb[0].mxu0
    %v945 = vadd.f32 %v894, %v944
    %v946 = vpop.f32.mrb[0].mxu0
    %v947 = vpop.f32.mrb[0].mxu0
    %v948 = vadd.f32 %v894, %v947
    %v949 = vpop.f32.mrb[0].mxu0
    %950 = vdwg.mxu0
    %v951 = vmul.f32 %v945, %v945
    %v952 = vmul.f32 %v948, %v948
    %v953 = vmul.f32 %v945, %v951
    %v954 = vmul.f32 %v948, %v952
    %v955 = vmul.f32 %v953, 0.044715
    %v956 = vmul.f32 %v954, 0.044715
    %v957 = vadd.f32 %v945, %v955
    %v958 = vadd.f32 %v948, %v956
    %v959 = vmul.f32 %v957, 0.7978846
    %v960 = vmul.f32 %v958, 0.7978846
    %v961 = vtanh.pop %v959
    %v962 = vtanh.pop %v960
    %v963 = vadd.f32 %v961, 1.0
    %v964 = vadd.f32 %v962, 1.0
    %v965 = vmul.f32 %v963, 0.5
    %v966 = vmul.f32 %v964, 0.5
    %v967 = vmul.f32 %v945, %v965
    %v968 = vmul.f32 %v948, %v966
    %v969 = vpack.c.bf16 %v968, %v967
    %v970 = vld [vmem:[#allocation2 + $0x50] sm:$0xf]
    %v971 = vld [vmem:[#allocation2 + $0x54] sm:$0xf]
    %v972 = vld [vmem:[#allocation2 + $0x58] sm:$0xf]
    %v973 = vld [vmem:[#allocation2 + $0x5c] sm:$0xf]
    %v974 = vld [vmem:[#allocation2 + $0x60] sm:$0xf]
    %v975 = vld [vmem:[#allocation2 + $0x64] sm:$0xf]
    %v976 = vld [vmem:[#allocation2 + $0x68] sm:$0xf]
    %v977 = vld [vmem:[#allocation2 + $0x6c] sm:$0xf]
    %v978 = vld [vmem:[#allocation5 + $0x48] sm:$0x1]
    %v979 = vlaneseq
    %v980 = vshrl.u32 %v979, 7
    %v981 = vsub.s32 0, %v980
    %v982 = vrot.slane %v978, %v981
    %v991 = vunpack.c.l.b16 %v970
    %v992 = vunpack.c.l.b16 %v971
    %v993 = vunpack.c.l.b16 %v972
    %v994 = vunpack.c.l.b16 %v973
    %v995 = vunpack.c.l.b16 %v974
    %v996 = vunpack.c.l.b16 %v975
    %v997 = vunpack.c.l.b16 %v976
    %v998 = vunpack.c.l.b16 %v977
    %v999 = vpack.c.b16 %v992, %v991
    %v1000 = vpack.c.b16 %v994, %v993
    %v1001 = vpack.c.b16 %v996, %v995
    %v1002 = vpack.c.b16 %v998, %v997
    %v1008 = vsel %vm98, %v969, 0
    %1010 = vmatprep.subr.bf16.mxu0 0
    %1011 = vmatpush1.bf16.msra.mxu0 %v999
    %1012 = vmatprep.subr.bf16.mxu0 0
    %1013 = vmatpush1.bf16.msra.mxu0 %v1000
    %1014 = vmatprep.subr.bf16.mxu0 0
    %1015 = vmatpush1.bf16.msra.mxu0 %v1001
    %1016 = vmatprep.subr.bf16.mxu0 0
    %1017 = vmatpush1.bf16.msra.mxu0 %v1002
    %1018 = vmatprep.subr.bf16.mxu0 0
    %1019 = vmatpush1.bf16.msra.mxu0 0
    %1020 = vmatprep.subr.bf16.mxu0 0
    %1021 = vmatpush1.bf16.msra.mxu0 0
    %1022 = vmatprep.subr.bf16.mxu0 0
    %1023 = vmatpush1.bf16.msra.mxu0 0
    %1024 = vmatprep.subr.bf16.mxu0 0
    %1025 = vmatpush1.bf16.msra.mxu0 0
    %1026 = vmatprep.subr.bf16.mxu0 0
    %1027 = vmatpush1.bf16.msra.mxu0 0
    %1028 = vmatprep.subr.bf16.mxu0 0
    %1029 = vmatpush1.bf16.msra.mxu0 0
    %1030 = vmatprep.subr.bf16.mxu0 0
    %1031 = vmatpush1.bf16.msra.mxu0 0
    %1032 = vmatprep.subr.bf16.mxu0 0
    %1033 = vmatpush1.bf16.msra.mxu0 0
    %1034 = vmatprep.subr.bf16.mxu0 0
    %1035 = vmatpush1.bf16.msra.mxu0 0
    %1036 = vmatprep.subr.bf16.mxu0 0
    %1037 = vmatpush1.bf16.msra.mxu0 0
    %1038 = vmatprep.subr.bf16.mxu0 0
    %1039 = vmatpush1.bf16.msra.mxu0 0
    %1040 = vmatprep.subr.bf16.mxu0 0
    %1041 = vmatpush1.bf16.msra.mxu0 0
    %1042 = vmatprep.mubr.bf16.mxu0 0
    %1043 = vmatmul.mubr.bf16.gmra.mrb[0].mxu0 %v1008
    %v1044 = vpop.f32.mrb[0].mxu0
    %v1045 = vadd.f32 %v982, %v1044
    %v1046 = vpop.f32.mrb[0].mxu0
    %v1047 = vpop.f32.mrb[0].mxu0
    %v1048 = vadd.f32 %v982, %v1047
    %v1049 = vpop.f32.mrb[0].mxu0
    %1050 = vdwg.mxu0
    %v1051 = vadd.f32 %v1045, %v883
    %v1052 = vadd.f32 %v1048, %v884
    %v1053 = vld [vmem:[#allocation5 + $0x50] sm:$0x1]
    %v1054 = vld [vmem:[#allocation5 + $0x58] sm:$0x1]
    %v1055 = vsel %vm145, %v1051, 0.0
    %1056 = vadd.xlane.f32.xlu0 %v1055
    %v1057 = vpop.xlane.xlu0 %1056
    %v1058 = vsel %vm145, %v1052, 0.0
    %1059 = vadd.xlane.f32.xlu0 %v1058
    %v1060 = vpop.xlane.xlu0 %1059
    %v1061 = vmul.f32 %v1057, %v152
    %v1062 = vmul.f32 %v1060, %v152
    %v1063 = vsub.f32 %v1051, %v1061
    %v1064 = vsub.f32 %v1052, %v1062
    %v1065 = vmul.f32 %v1063, %v1063
    %v1066 = vmul.f32 %v1064, %v1064
    %v1067 = vsel %vm145, %v1065, 0.0
    %1068 = vadd.xlane.f32.xlu0 %v1067
    %v1069 = vpop.xlane.xlu0 %1068
    %v1070 = vsel %vm145, %v1066, 0.0
    %1071 = vadd.xlane.f32.xlu0 %v1070
    %v1072 = vpop.xlane.xlu0 %1071
    %v1073 = vmul.f32 %v1069, %v152
    %v1074 = vmul.f32 %v1072, %v152
    %v1075 = vadd.f32 %v1073, 1e-12
    %v1076 = vadd.f32 %v1074, 1e-12
    %v1077 = vrsqrt.pop %v1075
    %v1078 = vrsqrt.pop %v1076
    %v1079 = vmul.f32 %v1063, %v1077
    %v1080 = vmul.f32 %v1064, %v1078
    %v1081 = vlaneseq
    %v1082 = vshrl.u32 %v1081, 7
    %v1083 = vsub.s32 0, %v1082
    %v1084 = vrot.slane %v1053, %v1083
    %v1085 = vmul.f32 %v1079, %v1084
    %v1086 = vmul.f32 %v1080, %v1084
    %v1087 = vlaneseq
    %v1088 = vshrl.u32 %v1087, 7
    %v1089 = vsub.s32 0, %v1088
    %v1090 = vrot.slane %v1054, %v1089
    %v1091 = vadd.f32 %v1085, %v1090
    %v1092 = vadd.f32 %v1086, %v1090
    %v1093 = vpack.c.bf16 %v1092, %v1091
    %v1094 = vld [vmem:[#allocation2 + $0x70] sm:$0xf]
    %v1095 = vld [vmem:[#allocation2 + $0x74] sm:$0xf]
    %v1096 = vld [vmem:[#allocation2 + $0x78] sm:$0xf]
    %v1097 = vld [vmem:[#allocation2 + $0x7c] sm:$0xf]
    %v1098 = vld [vmem:[#allocation5 + $0x60] sm:$0x1]
    %v1099 = vlaneseq
    %v1100 = vshrl.u32 %v1099, 7
    %v1101 = vsub.s32 0, %v1100
    %v1102 = vrot.slane %v1098, %v1101
    %v1107 = vunpack.c.l.b16 %v1094
    %v1108 = vunpack.c.l.b16 %v1095
    %v1109 = vunpack.c.l.b16 %v1096
    %v1110 = vunpack.c.l.b16 %v1097
    %v1111 = vpack.c.b16 %v1108, %v1107
    %v1112 = vpack.c.b16 %v1110, %v1109
    %v1116 = vsel %vm145, %v1093, 0
    %1118 = vmatprep.subr.bf16.mxu0 0
    %1119 = vmatpush1.bf16.msra.mxu0 %v1111
    %1120 = vmatprep.subr.bf16.mxu0 0
    %1121 = vmatpush1.bf16.msra.mxu0 %v1112
    %1122 = vmatprep.subr.bf16.mxu0 0
    %1123 = vmatpush1.bf16.msra.mxu0 0
    %1124 = vmatprep.subr.bf16.mxu0 0
    %1125 = vmatpush1.bf16.msra.mxu0 0
    %1126 = vmatprep.subr.bf16.mxu0 0
    %1127 = vmatpush1.bf16.msra.mxu0 0
    %1128 = vmatprep.subr.bf16.mxu0 0
    %1129 = vmatpush1.bf16.msra.mxu0 0
    %1130 = vmatprep.subr.bf16.mxu0 0
    %1131 = vmatpush1.bf16.msra.mxu0 0
    %1132 = vmatprep.subr.bf16.mxu0 0
    %1133 = vmatpush1.bf16.msra.mxu0 0
    %1134 = vmatprep.subr.bf16.mxu0 0
    %1135 = vmatpush1.bf16.msra.mxu0 0
    %1136 = vmatprep.subr.bf16.mxu0 0
    %1137 = vmatpush1.bf16.msra.mxu0 0
    %1138 = vmatprep.subr.bf16.mxu0 0
    %1139 = vmatpush1.bf16.msra.mxu0 0
    %1140 = vmatprep.subr.bf16.mxu0 0
    %1141 = vmatpush1.bf16.msra.mxu0 0
    %1142 = vmatprep.subr.bf16.mxu0 0
    %1143 = vmatpush1.bf16.msra.mxu0 0
    %1144 = vmatprep.subr.bf16.mxu0 0
    %1145 = vmatpush1.bf16.msra.mxu0 0
    %1146 = vmatprep.subr.bf16.mxu0 0
    %1147 = vmatpush1.bf16.msra.mxu0 0
    %1148 = vmatprep.subr.bf16.mxu0 0
    %1149 = vmatpush1.bf16.msra.mxu0 0
    %1150 = vmatprep.mubr.bf16.mxu0 0
    %1151 = vmatmul.mubr.bf16.gmra.mrb[0].mxu0 %v1116
    %v1152 = vpop.f32.mrb[0].mxu0
    %v1153 = vadd.f32 %v1102, %v1152
    %v1154 = vpop.f32.mrb[0].mxu0
    %v1155 = vpop.f32.mrb[0].mxu0
    %v1156 = vadd.f32 %v1102, %v1155
    %v1157 = vpop.f32.mrb[0].mxu0
    %1158 = vdwg.mxu0
    %v1159 = vpack.c.bf16 %v1153, %v1153
    %v1160 = vpack.c.bf16 %v1156, %v1156
    %1162 = vrot.lane.b32.xlu0 %v1159, 96
    %v1163 = vpop.permute.xlu0 %1162
    %v1165 = vsel %vm292, %v1159, 0
    %v1168 = vsel %vm292, %v1163, 0
    %1170 = vmatprep.subr.bf16.mxu0 0
    %1171 = vmatpush1.bf16.xpose.msra.mxu0 %v1168
    %1172 = vmatprep.subr.bf16.mxu0 0
    %1173 = vmatpush1.bf16.xpose.msra.mxu0 0
    %1174 = vmatprep.subr.bf16.mxu0 0
    %1175 = vmatpush1.bf16.xpose.msra.mxu0 0
    %1176 = vmatprep.subr.bf16.mxu0 0
    %1177 = vmatpush1.bf16.xpose.msra.mxu0 0
    %1178 = vmatprep.subr.bf16.mxu0 0
    %1179 = vmatpush1.bf16.xpose.msra.mxu0 0
    %1180 = vmatprep.subr.bf16.mxu0 0
    %1181 = vmatpush1.bf16.xpose.msra.mxu0 0
    %1182 = vmatprep.subr.bf16.mxu0 0
    %1183 = vmatpush1.bf16.xpose.msra.mxu0 0
    %1184 = vmatprep.subr.bf16.mxu0 0
    %1185 = vmatpush1.bf16.xpose.msra.mxu0 0
    %1186 = vmatprep.subr.bf16.mxu0 0
    %1187 = vmatpush1.bf16.xpose.msra.mxu0 0
    %1188 = vmatprep.subr.bf16.mxu0 0
    %1189 = vmatpush1.bf16.xpose.msra.mxu0 0
    %1190 = vmatprep.subr.bf16.mxu0 0
    %1191 = vmatpush1.bf16.xpose.msra.mxu0 0
    %1192 = vmatprep.subr.bf16.mxu0 0
    %1193 = vmatpush1.bf16.xpose.msra.mxu0 0
    %1194 = vmatprep.subr.bf16.mxu0 0
    %1195 = vmatpush1.bf16.xpose.msra.mxu0 0
    %1196 = vmatprep.subr.bf16.mxu0 0
    %1197 = vmatpush1.bf16.xpose.msra.mxu0 0
    %1198 = vmatprep.subr.bf16.mxu0 0
    %1199 = vmatpush1.bf16.xpose.msra.mxu0 0
    %1200 = vmatprep.subr.bf16.mxu0 0
    %1201 = vmatpush1.bf16.xpose.msra.mxu0 0
    %1202 = vmatprep.mubr.bf16.mxu0 0
    %1203 = vmatmul.mubr.bf16.gmra.mrb[0].mxu0 %v1165
    %v1204 = vpop.f32.mrb[0].mxu0
    %v1205 = vadd.f32 %v282, %v1204
    %v1206 = vpop.f32.mrb[0].mxu0
    %v1207 = vpop.f32.mrb[0].mxu0
    %v1208 = vpop.f32.mrb[0].mxu0
    %1209 = vdwg.mxu0
    %1211 = vrot.lane.b32.xlu0 %v1160, 96
    %v1212 = vpop.permute.xlu0 %1211
    %v1214 = vsel %vm292, %v1160, 0
    %v1217 = vsel %vm292, %v1212, 0
    %1219 = vmatprep.subr.bf16.mxu0 0
    %1220 = vmatpush1.bf16.xpose.msra.mxu0 %v1217
    %1221 = vmatprep.subr.bf16.mxu0 0
    %1222 = vmatpush1.bf16.xpose.msra.mxu0 0
    %1223 = vmatprep.subr.bf16.mxu0 0
    %1224 = vmatpush1.bf16.xpose.msra.mxu0 0
    %1225 = vmatprep.subr.bf16.mxu0 0
    %1226 = vmatpush1.bf16.xpose.msra.mxu0 0
    %1227 = vmatprep.subr.bf16.mxu0 0
    %1228 = vmatpush1.bf16.xpose.msra.mxu0 0
    %1229 = vmatprep.subr.bf16.mxu0 0
    %1230 = vmatpush1.bf16.xpose.msra.mxu0 0
    %1231 = vmatprep.subr.bf16.mxu0 0
    %1232 = vmatpush1.bf16.xpose.msra.mxu0 0
    %1233 = vmatprep.subr.bf16.mxu0 0
    %1234 = vmatpush1.bf16.xpose.msra.mxu0 0
    %1235 = vmatprep.subr.bf16.mxu0 0
    %1236 = vmatpush1.bf16.xpose.msra.mxu0 0
    %1237 = vmatprep.subr.bf16.mxu0 0
    %1238 = vmatpush1.bf16.xpose.msra.mxu0 0
    %1239 = vmatprep.subr.bf16.mxu0 0
    %1240 = vmatpush1.bf16.xpose.msra.mxu0 0
    %1241 = vmatprep.subr.bf16.mxu0 0
    %1242 = vmatpush1.bf16.xpose.msra.mxu0 0
    %1243 = vmatprep.subr.bf16.mxu0 0
    %1244 = vmatpush1.bf16.xpose.msra.mxu0 0
    %1245 = vmatprep.subr.bf16.mxu0 0
    %1246 = vmatpush1.bf16.xpose.msra.mxu0 0
    %1247 = vmatprep.subr.bf16.mxu0 0
    %1248 = vmatpush1.bf16.xpose.msra.mxu0 0
    %1249 = vmatprep.subr.bf16.mxu0 0
    %1250 = vmatpush1.bf16.xpose.msra.mxu0 0
    %1251 = vmatprep.mubr.bf16.mxu0 0
    %1252 = vmatmul.mubr.bf16.gmra.mrb[0].mxu0 %v1214
    %v1253 = vpop.f32.mrb[0].mxu0
    %v1254 = vadd.f32 %v286, %v1253
    %v1255 = vpop.f32.mrb[0].mxu0
    %v1256 = vpop.f32.mrb[0].mxu0
    %v1257 = vpop.f32.mrb[0].mxu0
    %1258 = vdwg.mxu0
    %v1259 = vsel %vm388, %v1205, -inf
    %1260 = vmax.xlane.f32.xlu0 %v1259
    %v1261 = vpop.xlane.xlu0 %1260
    %v1262 = vsel %vm388, %v1254, -inf
    %1263 = vmax.xlane.f32.xlu0 %v1262
    %v1264 = vpop.xlane.xlu0 %1263
    %v1265 = vsub.f32 %v1205, %v1261
    %v1266 = vsub.f32 %v1254, %v1264
    %v1267 = vmul.f32 %v1265, 1.442695
    %v1268 = vpow.pop %v1267
    %v1269 = vmul.f32 %v1266, 1.442695
    %v1270 = vpow.pop %v1269
    %v1271 = vsel %vm388, %v1268, 0.0
    %1272 = vadd.xlane.f32.xlu0 %v1271
    %v1273 = vpop.xlane.xlu0 %1272
    %v1274 = vsel %vm388, %v1270, 0.0
    %1275 = vadd.xlane.f32.xlu0 %v1274
    %v1276 = vpop.xlane.xlu0 %1275
    %v1277 = vrcp.pop %v1273
    %v1278 = vrcp.pop %v1276
    %v1279 = vmul.f32 %v1268, %v1277
    %v1280 = vmul.f32 %v1270, %v1278
    %v1281 = vpack.c.bf16 %v1279, %v1279
    %v1282 = vpack.c.bf16 %v1280, %v1280
    %1283 = vrot.lane.b32.xlu0 %v1159, 64
    %v1284 = vpop.permute.xlu0 %1283
    %v1286 = vsel %vm388, %v1281, 0
    %v1289 = vsel %vm418, %v1284, 0
    %1291 = vmatprep.subr.bf16.mxu0 0
    %1292 = vmatpush1.bf16.msra.mxu0 %v1289
    %1293 = vmatprep.subr.bf16.mxu0 0
    %1294 = vmatpush1.bf16.msra.mxu0 0
    %1295 = vmatprep.subr.bf16.mxu0 0
    %1296 = vmatpush1.bf16.msra.mxu0 0
    %1297 = vmatprep.subr.bf16.mxu0 0
    %1298 = vmatpush1.bf16.msra.mxu0 0
    %1299 = vmatprep.subr.bf16.mxu0 0
    %1300 = vmatpush1.bf16.msra.mxu0 0
    %1301 = vmatprep.subr.bf16.mxu0 0
    %1302 = vmatpush1.bf16.msra.mxu0 0
    %1303 = vmatprep.subr.bf16.mxu0 0
    %1304 = vmatpush1.bf16.msra.mxu0 0
    %1305 = vmatprep.subr.bf16.mxu0 0
    %1306 = vmatpush1.bf16.msra.mxu0 0
    %1307 = vmatprep.subr.bf16.mxu0 0
    %1308 = vmatpush1.bf16.msra.mxu0 0
    %1309 = vmatprep.subr.bf16.mxu0 0
    %1310 = vmatpush1.bf16.msra.mxu0 0
    %1311 = vmatprep.subr.bf16.mxu0 0
    %1312 = vmatpush1.bf16.msra.mxu0 0
    %1313 = vmatprep.subr.bf16.mxu0 0
    %1314 = vmatpush1.bf16.msra.mxu0 0
    %1315 = vmatprep.subr.bf16.mxu0 0
    %1316 = vmatpush1.bf16.msra.mxu0 0
    %1317 = vmatprep.subr.bf16.mxu0 0
    %1318 = vmatpush1.bf16.msra.mxu0 0
    %1319 = vmatprep.subr.bf16.mxu0 0
    %1320 = vmatpush1.bf16.msra.mxu0 0
    %1321 = vmatprep.subr.bf16.mxu0 0
    %1322 = vmatpush1.bf16.msra.mxu0 0
    %1323 = vmatprep.mubr.bf16.mxu0 0
    %1324 = vmatmul.mubr.bf16.gmra.mrb[0].mxu0 %v1286
    %v1325 = vpop.f32.mrb[0].mxu0
    %v1326 = vadd.f32 0.0, %v1325
    %v1327 = vpop.f32.mrb[0].mxu0
    %v1328 = vpop.f32.mrb[0].mxu0
    %v1329 = vpop.f32.mrb[0].mxu0
    %1330 = vdwg.mxu0
    %1331 = vrot.lane.b32.xlu0 %v1160, 64
    %v1332 = vpop.permute.xlu0 %1331
    %v1334 = vsel %vm388, %v1282, 0
    %v1337 = vsel %vm418, %v1332, 0
    %1339 = vmatprep.subr.bf16.mxu0 0
    %1340 = vmatpush1.bf16.msra.mxu0 %v1337
    %1341 = vmatprep.subr.bf16.mxu0 0
    %1342 = vmatpush1.bf16.msra.mxu0 0
    %1343 = vmatprep.subr.bf16.mxu0 0
    %1344 = vmatpush1.bf16.msra.mxu0 0
    %1345 = vmatprep.subr.bf16.mxu0 0
    %1346 = vmatpush1.bf16.msra.mxu0 0
    %1347 = vmatprep.subr.bf16.mxu0 0
    %1348 = vmatpush1.bf16.msra.mxu0 0
    %1349 = vmatprep.subr.bf16.mxu0 0
    %1350 = vmatpush1.bf16.msra.mxu0 0
    %1351 = vmatprep.subr.bf16.mxu0 0
    %1352 = vmatpush1.bf16.msra.mxu0 0
    %1353 = vmatprep.subr.bf16.mxu0 0
    %1354 = vmatpush1.bf16.msra.mxu0 0
    %1355 = vmatprep.subr.bf16.mxu0 0
    %1356 = vmatpush1.bf16.msra.mxu0 0
    %1357 = vmatprep.subr.bf16.mxu0 0
    %1358 = vmatpush1.bf16.msra.mxu0 0
    %1359 = vmatprep.subr.bf16.mxu0 0
    %1360 = vmatpush1.bf16.msra.mxu0 0
    %1361 = vmatprep.subr.bf16.mxu0 0
    %1362 = vmatpush1.bf16.msra.mxu0 0
    %1363 = vmatprep.subr.bf16.mxu0 0
    %1364 = vmatpush1.bf16.msra.mxu0 0
    %1365 = vmatprep.subr.bf16.mxu0 0
    %1366 = vmatpush1.bf16.msra.mxu0 0
    %1367 = vmatprep.subr.bf16.mxu0 0
    %1368 = vmatpush1.bf16.msra.mxu0 0
    %1369 = vmatprep.subr.bf16.mxu0 0
    %1370 = vmatpush1.bf16.msra.mxu0 0
    %1371 = vmatprep.mubr.bf16.mxu0 0
    %1372 = vmatmul.mubr.bf16.gmra.mrb[0].mxu0 %v1334
    %v1373 = vpop.f32.mrb[0].mxu0
    %v1374 = vadd.f32 0.0, %v1373
    %v1375 = vpop.f32.mrb[0].mxu0
    %v1376 = vpop.f32.mrb[0].mxu0
    %v1377 = vpop.f32.mrb[0].mxu0
    %1378 = vdwg.mxu0
    %v1379 = vpack.c.bf16 %v1374, %v1326
    %v1380 = vld [vmem:[#allocation2 + $0x80] sm:$0xf]
    %v1381 = vld [vmem:[#allocation2 + $0x84] sm:$0xf]
    %1382 = vrot.lane.b32.xlu0 %v1159, 112
    %v1383 = vpop.permute.xlu0 %1382
    %1384 = vrot.lane.b32.xlu0 %v1159, 80
    %v1385 = vpop.permute.xlu0 %1384
    %v1387 = vsel %vm292, %v1383, 0
    %v1390 = vsel %vm292, %v1385, 0
    %1392 = vmatprep.subr.bf16.mxu0 0
    %1393 = vmatpush1.bf16.xpose.msra.mxu0 %v1390
    %1394 = vmatprep.subr.bf16.mxu0 0
    %1395 = vmatpush1.bf16.xpose.msra.mxu0 0
    %1396 = vmatprep.subr.bf16.mxu0 0
    %1397 = vmatpush1.bf16.xpose.msra.mxu0 0
    %1398 = vmatprep.subr.bf16.mxu0 0
    %1399 = vmatpush1.bf16.xpose.msra.mxu0 0
    %1400 = vmatprep.subr.bf16.mxu0 0
    %1401 = vmatpush1.bf16.xpose.msra.mxu0 0
    %1402 = vmatprep.subr.bf16.mxu0 0
    %1403 = vmatpush1.bf16.xpose.msra.mxu0 0
    %1404 = vmatprep.subr.bf16.mxu0 0
    %1405 = vmatpush1.bf16.xpose.msra.mxu0 0
    %1406 = vmatprep.subr.bf16.mxu0 0
    %1407 = vmatpush1.bf16.xpose.msra.mxu0 0
    %1408 = vmatprep.subr.bf16.mxu0 0
    %1409 = vmatpush1.bf16.xpose.msra.mxu0 0
    %1410 = vmatprep.subr.bf16.mxu0 0
    %1411 = vmatpush1.bf16.xpose.msra.mxu0 0
    %1412 = vmatprep.subr.bf16.mxu0 0
    %1413 = vmatpush1.bf16.xpose.msra.mxu0 0
    %1414 = vmatprep.subr.bf16.mxu0 0
    %1415 = vmatpush1.bf16.xpose.msra.mxu0 0
    %1416 = vmatprep.subr.bf16.mxu0 0
    %1417 = vmatpush1.bf16.xpose.msra.mxu0 0
    %1418 = vmatprep.subr.bf16.mxu0 0
    %1419 = vmatpush1.bf16.xpose.msra.mxu0 0
    %1420 = vmatprep.subr.bf16.mxu0 0
    %1421 = vmatpush1.bf16.xpose.msra.mxu0 0
    %1422 = vmatprep.subr.bf16.mxu0 0
    %1423 = vmatpush1.bf16.xpose.msra.mxu0 0
    %1424 = vmatprep.mubr.bf16.mxu0 0
    %1425 = vmatmul.mubr.bf16.gmra.mrb[0].mxu0 %v1387
    %v1426 = vpop.f32.mrb[0].mxu0
    %v1427 = vadd.f32 %v282, %v1426
    %v1428 = vpop.f32.mrb[0].mxu0
    %v1429 = vpop.f32.mrb[0].mxu0
    %v1430 = vpop.f32.mrb[0].mxu0
    %1431 = vdwg.mxu0
    %1432 = vrot.lane.b32.xlu0 %v1160, 112
    %v1433 = vpop.permute.xlu0 %1432
    %1434 = vrot.lane.b32.xlu0 %v1160, 80
    %v1435 = vpop.permute.xlu0 %1434
    %v1437 = vsel %vm292, %v1433, 0
    %v1440 = vsel %vm292, %v1435, 0
    %1442 = vmatprep.subr.bf16.mxu0 0
    %1443 = vmatpush1.bf16.xpose.msra.mxu0 %v1440
    %1444 = vmatprep.subr.bf16.mxu0 0
    %1445 = vmatpush1.bf16.xpose.msra.mxu0 0
    %1446 = vmatprep.subr.bf16.mxu0 0
    %1447 = vmatpush1.bf16.xpose.msra.mxu0 0
    %1448 = vmatprep.subr.bf16.mxu0 0
    %1449 = vmatpush1.bf16.xpose.msra.mxu0 0
    %1450 = vmatprep.subr.bf16.mxu0 0
    %1451 = vmatpush1.bf16.xpose.msra.mxu0 0
    %1452 = vmatprep.subr.bf16.mxu0 0
    %1453 = vmatpush1.bf16.xpose.msra.mxu0 0
    %1454 = vmatprep.subr.bf16.mxu0 0
    %1455 = vmatpush1.bf16.xpose.msra.mxu0 0
    %1456 = vmatprep.subr.bf16.mxu0 0
    %1457 = vmatpush1.bf16.xpose.msra.mxu0 0
    %1458 = vmatprep.subr.bf16.mxu0 0
    %1459 = vmatpush1.bf16.xpose.msra.mxu0 0
    %1460 = vmatprep.subr.bf16.mxu0 0
    %1461 = vmatpush1.bf16.xpose.msra.mxu0 0
    %1462 = vmatprep.subr.bf16.mxu0 0
    %1463 = vmatpush1.bf16.xpose.msra.mxu0 0
    %1464 = vmatprep.subr.bf16.mxu0 0
    %1465 = vmatpush1.bf16.xpose.msra.mxu0 0
    %1466 = vmatprep.subr.bf16.mxu0 0
    %1467 = vmatpush1.bf16.xpose.msra.mxu0 0
    %1468 = vmatprep.subr.bf16.mxu0 0
    %1469 = vmatpush1.bf16.xpose.msra.mxu0 0
    %1470 = vmatprep.subr.bf16.mxu0 0
    %1471 = vmatpush1.bf16.xpose.msra.mxu0 0
    %1472 = vmatprep.subr.bf16.mxu0 0
    %1473 = vmatpush1.bf16.xpose.msra.mxu0 0
    %1474 = vmatprep.mubr.bf16.mxu0 0
    %1475 = vmatmul.mubr.bf16.gmra.mrb[0].mxu0 %v1437
    %v1476 = vpop.f32.mrb[0].mxu0
    %v1477 = vadd.f32 %v286, %v1476
    %v1478 = vpop.f32.mrb[0].mxu0
    %v1479 = vpop.f32.mrb[0].mxu0
    %v1480 = vpop.f32.mrb[0].mxu0
    %1481 = vdwg.mxu0
    %v1482 = vsel %vm388, %v1427, -inf
    %1483 = vmax.xlane.f32.xlu0 %v1482
    %v1484 = vpop.xlane.xlu0 %1483
    %v1485 = vsel %vm388, %v1477, -inf
    %1486 = vmax.xlane.f32.xlu0 %v1485
    %v1487 = vpop.xlane.xlu0 %1486
    %v1488 = vsub.f32 %v1427, %v1484
    %v1489 = vsub.f32 %v1477, %v1487
    %v1490 = vmul.f32 %v1488, 1.442695
    %v1491 = vpow.pop %v1490
    %v1492 = vmul.f32 %v1489, 1.442695
    %v1493 = vpow.pop %v1492
    %v1494 = vsel %vm388, %v1491, 0.0
    %1495 = vadd.xlane.f32.xlu0 %v1494
    %v1496 = vpop.xlane.xlu0 %1495
    %v1497 = vsel %vm388, %v1493, 0.0
    %1498 = vadd.xlane.f32.xlu0 %v1497
    %v1499 = vpop.xlane.xlu0 %1498
    %v1500 = vrcp.pop %v1496
    %v1501 = vrcp.pop %v1499
    %v1502 = vmul.f32 %v1491, %v1500
    %v1503 = vmul.f32 %v1493, %v1501
    %v1504 = vpack.c.bf16 %v1502, %v1502
    %v1505 = vpack.c.bf16 %v1503, %v1503
    %1506 = vrot.lane.b32.xlu0 %v1159, 48
    %v1507 = vpop.permute.xlu0 %1506
    %v1509 = vsel %vm388, %v1504, 0
    %v1512 = vsel %vm418, %v1507, 0
    %1514 = vmatprep.subr.bf16.mxu0 0
    %1515 = vmatpush1.bf16.msra.mxu0 %v1512
    %1516 = vmatprep.subr.bf16.mxu0 0
    %1517 = vmatpush1.bf16.msra.mxu0 0
    %1518 = vmatprep.subr.bf16.mxu0 0
    %1519 = vmatpush1.bf16.msra.mxu0 0
    %1520 = vmatprep.subr.bf16.mxu0 0
    %1521 = vmatpush1.bf16.msra.mxu0 0
    %1522 = vmatprep.subr.bf16.mxu0 0
    %1523 = vmatpush1.bf16.msra.mxu0 0
    %1524 = vmatprep.subr.bf16.mxu0 0
    %1525 = vmatpush1.bf16.msra.mxu0 0
    %1526 = vmatprep.subr.bf16.mxu0 0
    %1527 = vmatpush1.bf16.msra.mxu0 0
    %1528 = vmatprep.subr.bf16.mxu0 0
    %1529 = vmatpush1.bf16.msra.mxu0 0
    %1530 = vmatprep.subr.bf16.mxu0 0
    %1531 = vmatpush1.bf16.msra.mxu0 0
    %1532 = vmatprep.subr.bf16.mxu0 0
    %1533 = vmatpush1.bf16.msra.mxu0 0
    %1534 = vmatprep.subr.bf16.mxu0 0
    %1535 = vmatpush1.bf16.msra.mxu0 0
    %1536 = vmatprep.subr.bf16.mxu0 0
    %1537 = vmatpush1.bf16.msra.mxu0 0
    %1538 = vmatprep.subr.bf16.mxu0 0
    %1539 = vmatpush1.bf16.msra.mxu0 0
    %1540 = vmatprep.subr.bf16.mxu0 0
    %1541 = vmatpush1.bf16.msra.mxu0 0
    %1542 = vmatprep.subr.bf16.mxu0 0
    %1543 = vmatpush1.bf16.msra.mxu0 0
    %1544 = vmatprep.subr.bf16.mxu0 0
    %1545 = vmatpush1.bf16.msra.mxu0 0
    %1546 = vmatprep.mubr.bf16.mxu0 0
    %1547 = vmatmul.mubr.bf16.gmra.mrb[0].mxu0 %v1509
    %v1548 = vpop.f32.mrb[0].mxu0
    %v1549 = vadd.f32 0.0, %v1548
    %v1550 = vpop.f32.mrb[0].mxu0
    %v1551 = vpop.f32.mrb[0].mxu0
    %v1552 = vpop.f32.mrb[0].mxu0
    %1553 = vdwg.mxu0
    %1554 = vrot.lane.b32.xlu0 %v1160, 48
    %v1555 = vpop.permute.xlu0 %1554
    %v1557 = vsel %vm388, %v1505, 0
    %v1560 = vsel %vm418, %v1555, 0
    %1562 = vmatprep.subr.bf16.mxu0 0
    %1563 = vmatpush1.bf16.msra.mxu0 %v1560
    %1564 = vmatprep.subr.bf16.mxu0 0
    %1565 = vmatpush1.bf16.msra.mxu0 0
    %1566 = vmatprep.subr.bf16.mxu0 0
    %1567 = vmatpush1.bf16.msra.mxu0 0
    %1568 = vmatprep.subr.bf16.mxu0 0
    %1569 = vmatpush1.bf16.msra.mxu0 0
    %1570 = vmatprep.subr.bf16.mxu0 0
    %1571 = vmatpush1.bf16.msra.mxu0 0
    %1572 = vmatprep.subr.bf16.mxu0 0
    %1573 = vmatpush1.bf16.msra.mxu0 0
    %1574 = vmatprep.subr.bf16.mxu0 0
    %1575 = vmatpush1.bf16.msra.mxu0 0
    %1576 = vmatprep.subr.bf16.mxu0 0
    %1577 = vmatpush1.bf16.msra.mxu0 0
    %1578 = vmatprep.subr.bf16.mxu0 0
    %1579 = vmatpush1.bf16.msra.mxu0 0
    %1580 = vmatprep.subr.bf16.mxu0 0
    %1581 = vmatpush1.bf16.msra.mxu0 0
    %1582 = vmatprep.subr.bf16.mxu0 0
    %1583 = vmatpush1.bf16.msra.mxu0 0
    %1584 = vmatprep.subr.bf16.mxu0 0
    %1585 = vmatpush1.bf16.msra.mxu0 0
    %1586 = vmatprep.subr.bf16.mxu0 0
    %1587 = vmatpush1.bf16.msra.mxu0 0
    %1588 = vmatprep.subr.bf16.mxu0 0
    %1589 = vmatpush1.bf16.msra.mxu0 0
    %1590 = vmatprep.subr.bf16.mxu0 0
    %1591 = vmatpush1.bf16.msra.mxu0 0
    %1592 = vmatprep.subr.bf16.mxu0 0
    %1593 = vmatpush1.bf16.msra.mxu0 0
    %1594 = vmatprep.mubr.bf16.mxu0 0
    %1595 = vmatmul.mubr.bf16.gmra.mrb[0].mxu0 %v1557
    %v1596 = vpop.f32.mrb[0].mxu0
    %v1597 = vadd.f32 0.0, %v1596
    %v1598 = vpop.f32.mrb[0].mxu0
    %v1599 = vpop.f32.mrb[0].mxu0
    %v1600 = vpop.f32.mrb[0].mxu0
    %1601 = vdwg.mxu0
    %v1602 = vpack.c.bf16 %v1597, %v1549
    %v1603 = vld [vmem:[#allocation2 + $0x88] sm:$0xf]
    %v1604 = vld [vmem:[#allocation2 + $0x8c] sm:$0xf]
    %v1607 = vunpack.c.l.b16 %v1603
    %v1608 = vunpack.c.l.b16 %v1604
    %v1609 = vpack.c.b16 %v1608, %v1607
    %v1612 = vsel %vm292, %v1602, 0
    %1614 = vmatprep.subr.bf16.mxu0 0
    %1615 = vmatpush1.bf16.msra.mxu0 %v1609
    %1616 = vmatprep.subr.bf16.mxu0 0
    %1617 = vmatpush1.bf16.msra.mxu0 0
    %1618 = vmatprep.subr.bf16.mxu0 0
    %1619 = vmatpush1.bf16.msra.mxu0 0
    %1620 = vmatprep.subr.bf16.mxu0 0
    %1621 = vmatpush1.bf16.msra.mxu0 0
    %1622 = vmatprep.subr.bf16.mxu0 0
    %1623 = vmatpush1.bf16.msra.mxu0 0
    %1624 = vmatprep.subr.bf16.mxu0 0
    %1625 = vmatpush1.bf16.msra.mxu0 0
    %1626 = vmatprep.subr.bf16.mxu0 0
    %1627 = vmatpush1.bf16.msra.mxu0 0
    %1628 = vmatprep.subr.bf16.mxu0 0
    %1629 = vmatpush1.bf16.msra.mxu0 0
    %1630 = vmatprep.subr.bf16.mxu0 0
    %1631 = vmatpush1.bf16.msra.mxu0 0
    %1632 = vmatprep.subr.bf16.mxu0 0
    %1633 = vmatpush1.bf16.msra.mxu0 0
    %1634 = vmatprep.subr.bf16.mxu0 0
    %1635 = vmatpush1.bf16.msra.mxu0 0
    %1636 = vmatprep.subr.bf16.mxu0 0
    %1637 = vmatpush1.bf16.msra.mxu0 0
    %1638 = vmatprep.subr.bf16.mxu0 0
    %1639 = vmatpush1.bf16.msra.mxu0 0
    %1640 = vmatprep.subr.bf16.mxu0 0
    %1641 = vmatpush1.bf16.msra.mxu0 0
    %1642 = vmatprep.subr.bf16.mxu0 0
    %1643 = vmatpush1.bf16.msra.mxu0 0
    %1644 = vmatprep.subr.bf16.mxu0 0
    %1645 = vmatpush1.bf16.msra.mxu0 0
    %1646 = vmatprep.mubr.bf16.mxu0 0
    %1647 = vmatmul.mubr.bf16.gmra.mrb[0].mxu0 %v1612
    %v1648 = vpop.f32.mrb[0].mxu0
    %v1649 = vadd.f32 0.0, %v1648
    %v1650 = vpop.f32.mrb[0].mxu0
    %v1651 = vpop.f32.mrb[0].mxu0
    %v1652 = vadd.f32 0.0, %v1651
    %v1653 = vpop.f32.mrb[0].mxu0
    %1654 = vdwg.mxu0
    %v1657 = vunpack.c.l.b16 %v1380
    %v1658 = vunpack.c.l.b16 %v1381
    %v1659 = vpack.c.b16 %v1658, %v1657
    %v1662 = vsel %vm292, %v1379, 0
    %1664 = vmatprep.subr.bf16.mxu0 0
    %1665 = vmatpush1.bf16.msra.mxu0 %v1659
    %1666 = vmatprep.subr.bf16.mxu0 0
    %1667 = vmatpush1.bf16.msra.mxu0 0
    %1668 = vmatprep.subr.bf16.mxu0 0
    %1669 = vmatpush1.bf16.msra.mxu0 0
    %1670 = vmatprep.subr.bf16.mxu0 0
    %1671 = vmatpush1.bf16.msra.mxu0 0
    %1672 = vmatprep.subr.bf16.mxu0 0
    %1673 = vmatpush1.bf16.msra.mxu0 0
    %1674 = vmatprep.subr.bf16.mxu0 0
    %1675 = vmatpush1.bf16.msra.mxu0 0
    %1676 = vmatprep.subr.bf16.mxu0 0
    %1677 = vmatpush1.bf16.msra.mxu0 0
    %1678 = vmatprep.subr.bf16.mxu0 0
    %1679 = vmatpush1.bf16.msra.mxu0 0
    %1680 = vmatprep.subr.bf16.mxu0 0
    %1681 = vmatpush1.bf16.msra.mxu0 0
    %1682 = vmatprep.subr.bf16.mxu0 0
    %1683 = vmatpush1.bf16.msra.mxu0 0
    %1684 = vmatprep.subr.bf16.mxu0 0
    %1685 = vmatpush1.bf16.msra.mxu0 0
    %1686 = vmatprep.subr.bf16.mxu0 0
    %1687 = vmatpush1.bf16.msra.mxu0 0
    %1688 = vmatprep.subr.bf16.mxu0 0
    %1689 = vmatpush1.bf16.msra.mxu0 0
    %1690 = vmatprep.subr.bf16.mxu0 0
    %1691 = vmatpush1.bf16.msra.mxu0 0
    %1692 = vmatprep.subr.bf16.mxu0 0
    %1693 = vmatpush1.bf16.msra.mxu0 0
    %1694 = vmatprep.subr.bf16.mxu0 0
    %1695 = vmatpush1.bf16.msra.mxu0 0
    %1696 = vmatprep.mubr.bf16.mxu0 0
    %1697 = vmatmul.mubr.bf16.gmra.mrb[0].mxu0 %v1662
    %v1698 = vpop.f32.mrb[0].mxu0
    %v1699 = vadd.f32 %v1649, %v1698
    %v1700 = vpop.f32.mrb[0].mxu0
    %v1701 = vpop.f32.mrb[0].mxu0
    %v1702 = vadd.f32 %v1652, %v1701
    %v1703 = vpop.f32.mrb[0].mxu0
    %1704 = vdwg.mxu0
    %v1705 = vld [vmem:[#allocation5 + $0x68] sm:$0x1]
    %v1706 = vlaneseq
    %v1707 = vshrl.u32 %v1706, 7
    %v1708 = vsub.s32 0, %v1707
    %v1709 = vrot.slane %v1705, %v1708
    %v1710 = vadd.f32 %v1699, %v1709
    %v1711 = vadd.f32 %v1702, %v1709
    %v1712 = vadd.f32 %v1710, %v1091
    %v1713 = vadd.f32 %v1711, %v1092
    %v1714 = vld [vmem:[#allocation5 + $0x70] sm:$0x1]
    %v1715 = vld [vmem:[#allocation5 + $0x78] sm:$0x1]
    %v1716 = vsel %vm145, %v1712, 0.0
    %1717 = vadd.xlane.f32.xlu0 %v1716
    %v1718 = vpop.xlane.xlu0 %1717
    %v1719 = vsel %vm145, %v1713, 0.0
    %1720 = vadd.xlane.f32.xlu0 %v1719
    %v1721 = vpop.xlane.xlu0 %1720
    %v1722 = vmul.f32 %v1718, %v152
    %v1723 = vmul.f32 %v1721, %v152
    %v1724 = vsub.f32 %v1712, %v1722
    %v1725 = vsub.f32 %v1713, %v1723
    %v1726 = vmul.f32 %v1724, %v1724
    %v1727 = vmul.f32 %v1725, %v1725
    %v1728 = vsel %vm145, %v1726, 0.0
    %1729 = vadd.xlane.f32.xlu0 %v1728
    %v1730 = vpop.xlane.xlu0 %1729
    %v1731 = vsel %vm145, %v1727, 0.0
    %1732 = vadd.xlane.f32.xlu0 %v1731
    %v1733 = vpop.xlane.xlu0 %1732
    %v1734 = vmul.f32 %v1730, %v152
    %v1735 = vmul.f32 %v1733, %v152
    %v1736 = vadd.f32 %v1734, 1e-12
    %v1737 = vadd.f32 %v1735, 1e-12
    %v1738 = vrsqrt.pop %v1736
    %v1739 = vrsqrt.pop %v1737
    %v1740 = vmul.f32 %v1724, %v1738
    %v1741 = vmul.f32 %v1725, %v1739
    %v1742 = vlaneseq
    %v1743 = vshrl.u32 %v1742, 7
    %v1744 = vsub.s32 0, %v1743
    %v1745 = vrot.slane %v1714, %v1744
    %v1746 = vmul.f32 %v1740, %v1745
    %v1747 = vmul.f32 %v1741, %v1745
    %v1748 = vlaneseq
    %v1749 = vshrl.u32 %v1748, 7
    %v1750 = vsub.s32 0, %v1749
    %v1751 = vrot.slane %v1715, %v1750
    %v1752 = vadd.f32 %v1746, %v1751
    %v1753 = vadd.f32 %v1747, %v1751
    %v1754 = vpack.c.bf16 %v1753, %v1752
    %v1755 = vld [vmem:[#allocation2 + $0x90] sm:$0xf]
    %v1756 = vld [vmem:[#allocation2 + $0x94] sm:$0xf]
    %v1757 = vld [vmem:[#allocation2 + $0x98] sm:$0xf]
    %v1758 = vld [vmem:[#allocation2 + $0x9c] sm:$0xf]
    %v1759 = vld [vmem:[#allocation5 + $0x80] sm:$0x1]
    %v1760 = vlaneseq
    %v1761 = vshrl.u32 %v1760, 7
    %v1762 = vsub.s32 0, %v1761
    %v1763 = vrot.slane %v1759, %v1762
    %v1768 = vunpack.c.l.b16 %v1755
    %v1769 = vunpack.c.l.b16 %v1756
    %v1770 = vunpack.c.l.b16 %v1757
    %v1771 = vunpack.c.l.b16 %v1758
    %v1772 = vpack.c.b16 %v1769, %v1768
    %v1773 = vpack.c.b16 %v1771, %v1770
    %v1777 = vsel %vm145, %v1754, 0
    %1779 = vmatprep.subr.bf16.mxu0 0
    %1780 = vmatpush1.bf16.msra.mxu0 %v1772
    %1781 = vmatprep.subr.bf16.mxu0 0
    %1782 = vmatpush1.bf16.msra.mxu0 %v1773
    %1783 = vmatprep.subr.bf16.mxu0 0
    %1784 = vmatpush1.bf16.msra.mxu0 0
    %1785 = vmatprep.subr.bf16.mxu0 0
    %1786 = vmatpush1.bf16.msra.mxu0 0
    %1787 = vmatprep.subr.bf16.mxu0 0
    %1788 = vmatpush1.bf16.msra.mxu0 0
    %1789 = vmatprep.subr.bf16.mxu0 0
    %1790 = vmatpush1.bf16.msra.mxu0 0
    %1791 = vmatprep.subr.bf16.mxu0 0
    %1792 = vmatpush1.bf16.msra.mxu0 0
    %1793 = vmatprep.subr.bf16.mxu0 0
    %1794 = vmatpush1.bf16.msra.mxu0 0
    %1795 = vmatprep.subr.bf16.mxu0 0
    %1796 = vmatpush1.bf16.msra.mxu0 0
    %1797 = vmatprep.subr.bf16.mxu0 0
    %1798 = vmatpush1.bf16.msra.mxu0 0
    %1799 = vmatprep.subr.bf16.mxu0 0
    %1800 = vmatpush1.bf16.msra.mxu0 0
    %1801 = vmatprep.subr.bf16.mxu0 0
    %1802 = vmatpush1.bf16.msra.mxu0 0
    %1803 = vmatprep.subr.bf16.mxu0 0
    %1804 = vmatpush1.bf16.msra.mxu0 0
    %1805 = vmatprep.subr.bf16.mxu0 0
    %1806 = vmatpush1.bf16.msra.mxu0 0
    %1807 = vmatprep.subr.bf16.mxu0 0
    %1808 = vmatpush1.bf16.msra.mxu0 0
    %1809 = vmatprep.subr.bf16.mxu0 0
    %1810 = vmatpush1.bf16.msra.mxu0 0
    %1811 = vmatprep.mubr.bf16.mxu0 0
    %1812 = vmatmul.mubr.bf16.gmra.mrb[0].mxu0 %v1777
    %v1813 = vpop.f32.mrb[0].mxu0
    %v1814 = vadd.f32 %v1763, %v1813
    %v1815 = vpop.f32.mrb[0].mxu0
    %v1816 = vpop.f32.mrb[0].mxu0
    %v1817 = vadd.f32 %v1763, %v1816
    %v1818 = vpop.f32.mrb[0].mxu0
    %1819 = vdwg.mxu0
    %v1820 = vmul.f32 %v1814, %v1814
    %v1821 = vmul.f32 %v1817, %v1817
    %v1822 = vmul.f32 %v1814, %v1820
    %v1823 = vmul.f32 %v1817, %v1821
    %v1824 = vmul.f32 %v1822, 0.044715
    %v1825 = vmul.f32 %v1823, 0.044715
    %v1826 = vadd.f32 %v1814, %v1824
    %v1827 = vadd.f32 %v1817, %v1825
    %v1828 = vmul.f32 %v1826, 0.7978846
    %v1829 = vmul.f32 %v1827, 0.7978846
    %v1830 = vtanh.pop %v1828
    %v1831 = vtanh.pop %v1829
    %v1832 = vadd.f32 %v1830, 1.0
    %v1833 = vadd.f32 %v1831, 1.0
    %v1834 = vmul.f32 %v1832, 0.5
    %v1835 = vmul.f32 %v1833, 0.5
    %v1836 = vmul.f32 %v1814, %v1834
    %v1837 = vmul.f32 %v1817, %v1835
    %v1838 = vpack.c.bf16 %v1837, %v1836
    %v1839 = vld [vmem:[#allocation2 + $0xa0] sm:$0xf]
    %v1840 = vld [vmem:[#allocation2 + $0xa4] sm:$0xf]
    %v1841 = vld [vmem:[#allocation2 + $0xa8] sm:$0xf]
    %v1842 = vld [vmem:[#allocation2 + $0xac] sm:$0xf]
    %v1843 = vld [vmem:[#allocation2 + $0xb0] sm:$0xf]
    %v1844 = vld [vmem:[#allocation2 + $0xb4] sm:$0xf]
    %v1845 = vld [vmem:[#allocation2 + $0xb8] sm:$0xf]
    %v1846 = vld [vmem:[#allocation2 + $0xbc] sm:$0xf]
    %v1847 = vld [vmem:[#allocation5 + $0x88] sm:$0x1]
    %v1848 = vlaneseq
    %v1849 = vshrl.u32 %v1848, 7
    %v1850 = vsub.s32 0, %v1849
    %v1851 = vrot.slane %v1847, %v1850
    %v1860 = vunpack.c.l.b16 %v1839
    %v1861 = vunpack.c.l.b16 %v1840
    %v1862 = vunpack.c.l.b16 %v1841
    %v1863 = vunpack.c.l.b16 %v1842
    %v1864 = vunpack.c.l.b16 %v1843
    %v1865 = vunpack.c.l.b16 %v1844
    %v1866 = vunpack.c.l.b16 %v1845
    %v1867 = vunpack.c.l.b16 %v1846
    %v1868 = vpack.c.b16 %v1861, %v1860
    %v1869 = vpack.c.b16 %v1863, %v1862
    %v1870 = vpack.c.b16 %v1865, %v1864
    %v1871 = vpack.c.b16 %v1867, %v1866
    %v1877 = vsel %vm98, %v1838, 0
    %1879 = vmatprep.subr.bf16.mxu0 0
    %1880 = vmatpush1.bf16.msra.mxu0 %v1868
    %1881 = vmatprep.subr.bf16.mxu0 0
    %1882 = vmatpush1.bf16.msra.mxu0 %v1869
    %1883 = vmatprep.subr.bf16.mxu0 0
    %1884 = vmatpush1.bf16.msra.mxu0 %v1870
    %1885 = vmatprep.subr.bf16.mxu0 0
    %1886 = vmatpush1.bf16.msra.mxu0 %v1871
    %1887 = vmatprep.subr.bf16.mxu0 0
    %1888 = vmatpush1.bf16.msra.mxu0 0
    %1889 = vmatprep.subr.bf16.mxu0 0
    %1890 = vmatpush1.bf16.msra.mxu0 0
    %1891 = vmatprep.subr.bf16.mxu0 0
    %1892 = vmatpush1.bf16.msra.mxu0 0
    %1893 = vmatprep.subr.bf16.mxu0 0
    %1894 = vmatpush1.bf16.msra.mxu0 0
    %1895 = vmatprep.subr.bf16.mxu0 0
    %1896 = vmatpush1.bf16.msra.mxu0 0
    %1897 = vmatprep.subr.bf16.mxu0 0
    %1898 = vmatpush1.bf16.msra.mxu0 0
    %1899 = vmatprep.subr.bf16.mxu0 0
    %1900 = vmatpush1.bf16.msra.mxu0 0
    %1901 = vmatprep.subr.bf16.mxu0 0
    %1902 = vmatpush1.bf16.msra.mxu0 0
    %1903 = vmatprep.subr.bf16.mxu0 0
    %1904 = vmatpush1.bf16.msra.mxu0 0
    %1905 = vmatprep.subr.bf16.mxu0 0
    %1906 = vmatpush1.bf16.msra.mxu0 0
    %1907 = vmatprep.subr.bf16.mxu0 0
    %1908 = vmatpush1.bf16.msra.mxu0 0
    %1909 = vmatprep.subr.bf16.mxu0 0
    %1910 = vmatpush1.bf16.msra.mxu0 0
    %1911 = vmatprep.mubr.bf16.mxu0 0
    %1912 = vmatmul.mubr.bf16.gmra.mrb[0].mxu0 %v1877
    %v1913 = vpop.f32.mrb[0].mxu0
    %v1914 = vadd.f32 %v1851, %v1913
    %v1915 = vpop.f32.mrb[0].mxu0
    %v1916 = vpop.f32.mrb[0].mxu0
    %v1917 = vadd.f32 %v1851, %v1916
    %v1918 = vpop.f32.mrb[0].mxu0
    %1919 = vdwg.mxu0
    %v1920 = vadd.f32 %v1914, %v1752
    %v1921 = vadd.f32 %v1917, %v1753
    %v1922 = vld [vmem:[#allocation5 + $0x90] sm:$0x1]
    %v1923 = vld [vmem:[#allocation5 + $0x98] sm:$0x1]
    %v1924 = vsel %vm145, %v1920, 0.0
    %1925 = vadd.xlane.f32.xlu0 %v1924
    %v1926 = vpop.xlane.xlu0 %1925
    %v1927 = vsel %vm145, %v1921, 0.0
    %1928 = vadd.xlane.f32.xlu0 %v1927
    %v1929 = vpop.xlane.xlu0 %1928
    %v1930 = vmul.f32 %v1926, %v152
    %v1931 = vmul.f32 %v1929, %v152
    %v1932 = vsub.f32 %v1920, %v1930
    %v1933 = vsub.f32 %v1921, %v1931
    %v1934 = vmul.f32 %v1932, %v1932
    %v1935 = vmul.f32 %v1933, %v1933
    %v1936 = vsel %vm145, %v1934, 0.0
    %1937 = vadd.xlane.f32.xlu0 %v1936
    %v1938 = vpop.xlane.xlu0 %1937
    %v1939 = vsel %vm145, %v1935, 0.0
    %1940 = vadd.xlane.f32.xlu0 %v1939
    %v1941 = vpop.xlane.xlu0 %1940
    %v1942 = vmul.f32 %v1938, %v152
    %v1943 = vmul.f32 %v1941, %v152
    %v1944 = vadd.f32 %v1942, 1e-12
    %v1945 = vadd.f32 %v1943, 1e-12
    %v1946 = vrsqrt.pop %v1944
    %v1947 = vrsqrt.pop %v1945
    %v1948 = vmul.f32 %v1932, %v1946
    %v1949 = vmul.f32 %v1933, %v1947
    %v1950 = vlaneseq
    %v1951 = vshrl.u32 %v1950, 7
    %v1952 = vsub.s32 0, %v1951
    %v1953 = vrot.slane %v1922, %v1952
    %v1954 = vmul.f32 %v1948, %v1953
    %v1955 = vmul.f32 %v1949, %v1953
    %v1956 = vlaneseq
    %v1957 = vshrl.u32 %v1956, 7
    %v1958 = vsub.s32 0, %v1957
    %v1959 = vrot.slane %v1923, %v1958
    %v1960 = vadd.f32 %v1954, %v1959
    %v1961 = vadd.f32 %v1955, %v1959
    %v1962 = vpack.c.bf16 %v1960, %v1960
    %v1963 = vpack.c.bf16 %v1961, %v1961
    %v1964 = vld [vmem:[#allocation2 + $0xc0] sm:$0xf]
    %v1965 = vld [vmem:[#allocation2 + $0xc4] sm:$0xf]
    %v1966 = vld [vmem:[#allocation2 + $0xc8] sm:$0xf]
    %v1967 = vld [vmem:[#allocation2 + $0xcc] sm:$0xf]
    %v1968 = vld [vmem:[#allocation5 + $0xa0] sm:$0x1]
    %v1969 = vlaneseq
    %v1970 = vshrl.u32 %v1969, 7
    %v1971 = vsub.s32 0, %v1970
    %v1972 = vrot.slane %v1968, %v1971
    %v1975 = vunpack.c.l.b16 %v1962
    %v1976 = vunpack.c.l.b16 %v1963
    %v1977 = vrot.slane %v1976, 7
    %vm1978 = vcmask 1041409
    %v1979 = vsel %vm1978, %v1977, %v1975
    %v1980 = vpack.c.b16 %v1979, %v1979
    %v1985 = vunpack.c.l.b16 %v1964
    %v1986 = vunpack.c.l.b16 %v1965
    %v1987 = vunpack.c.l.b16 %v1966
    %v1988 = vunpack.c.l.b16 %v1967
    %v1989 = vpack.c.b16 %v1986, %v1985
    %v1990 = vpack.c.b16 %v1988, %v1987
    %v1994 = vsel %vm145, %v1980, 0
    %1996 = vmatprep.subr.bf16.mxu0 0
    %1997 = vmatpush1.bf16.msra.mxu0 %v1989
    %1998 = vmatprep.subr.bf16.mxu0 0
    %1999 = vmatpush1.bf16.msra.mxu0 %v1990
    %2000 = vmatprep.subr.bf16.mxu0 0
    %2001 = vmatpush1.bf16.msra.mxu0 0
    %2002 = vmatprep.subr.bf16.mxu0 0
    %2003 = vmatpush1.bf16.msra.mxu0 0
    %2004 = vmatprep.subr.bf16.mxu0 0
    %2005 = vmatpush1.bf16.msra.mxu0 0
    %2006 = vmatprep.subr.bf16.mxu0 0
    %2007 = vmatpush1.bf16.msra.mxu0 0
    %2008 = vmatprep.subr.bf16.mxu0 0
    %2009 = vmatpush1.bf16.msra.mxu0 0
    %2010 = vmatprep.subr.bf16.mxu0 0
    %2011 = vmatpush1.bf16.msra.mxu0 0
    %2012 = vmatprep.subr.bf16.mxu0 0
    %2013 = vmatpush1.bf16.msra.mxu0 0
    %2014 = vmatprep.subr.bf16.mxu0 0
    %2015 = vmatpush1.bf16.msra.mxu0 0
    %2016 = vmatprep.subr.bf16.mxu0 0
    %2017 = vmatpush1.bf16.msra.mxu0 0
    %2018 = vmatprep.subr.bf16.mxu0 0
    %2019 = vmatpush1.bf16.msra.mxu0 0
    %2020 = vmatprep.subr.bf16.mxu0 0
    %2021 = vmatpush1.bf16.msra.mxu0 0
    %2022 = vmatprep.subr.bf16.mxu0 0
    %2023 = vmatpush1.bf16.msra.mxu0 0
    %2024 = vmatprep.subr.bf16.mxu0 0
    %2025 = vmatpush1.bf16.msra.mxu0 0
    %2026 = vmatprep.subr.bf16.mxu0 0
    %2027 = vmatpush1.bf16.msra.mxu0 0
    %2028 = vmatprep.mubr.bf16.mxu0 0
    %2029 = vmatmul.mubr.bf16.gmra.mrb[0].mxu0 %v1994
    %v2030 = vpop.f32.mrb[0].mxu0
    %v2031 = vadd.f32 %v1972, %v2030
    %v2032 = vpop.f32.mrb[0].mxu0
    %v2033 = vpop.f32.mrb[0].mxu0
    %v2034 = vpop.f32.mrb[0].mxu0
    %2035 = vdwg.mxu0
    %v2036 = vtanh.pop %v2031
    %v2037 = vpack.c.bf16 %v2036, %v2036
    %v2038 = vld [vmem:[#allocation2 + $0xd0] sm:$0xf]
    %v2039 = vld [vmem:[#allocation2 + $0xd4] sm:$0xf]
    %v2040 = vld [vmem:[#allocation2 + $0xd8] sm:$0xf]
    %v2041 = vld [vmem:[#allocation2 + $0xdc] sm:$0xf]
    %v2042 = vld [vmem:[#allocation5 + $0xa8] sm:$0x1]
    %v2043 = vlaneseq
    %v2044 = vshrl.u32 %v2043, 7
    %v2045 = vsub.s32 0, %v2044
    %v2046 = vrot.slane %v2042, %v2045
    %v2051 = vunpack.c.l.b16 %v2038
    %v2052 = vunpack.c.l.b16 %v2039
    %v2053 = vunpack.c.l.b16 %v2040
    %v2054 = vunpack.c.l.b16 %v2041
    %v2055 = vpack.c.b16 %v2052, %v2051
    %v2056 = vpack.c.b16 %v2054, %v2053
    %v2060 = vsel %vm145, %v2037, 0
    %2062 = vmatprep.subr.bf16.mxu0 0
    %2063 = vmatpush1.bf16.msra.mxu0 %v2055
    %2064 = vmatprep.subr.bf16.mxu0 0
    %2065 = vmatpush1.bf16.msra.mxu0 %v2056
    %2066 = vmatprep.subr.bf16.mxu0 0
    %2067 = vmatpush1.bf16.msra.mxu0 0
    %2068 = vmatprep.subr.bf16.mxu0 0
    %2069 = vmatpush1.bf16.msra.mxu0 0
    %2070 = vmatprep.subr.bf16.mxu0 0
    %2071 = vmatpush1.bf16.msra.mxu0 0
    %2072 = vmatprep.subr.bf16.mxu0 0
    %2073 = vmatpush1.bf16.msra.mxu0 0
    %2074 = vmatprep.subr.bf16.mxu0 0
    %2075 = vmatpush1.bf16.msra.mxu0 0
    %2076 = vmatprep.subr.bf16.mxu0 0
    %2077 = vmatpush1.bf16.msra.mxu0 0
    %2078 = vmatprep.subr.bf16.mxu0 0
    %2079 = vmatpush1.bf16.msra.mxu0 0
    %2080 = vmatprep.subr.bf16.mxu0 0
    %2081 = vmatpush1.bf16.msra.mxu0 0
    %2082 = vmatprep.subr.bf16.mxu0 0
    %2083 = vmatpush1.bf16.msra.mxu0 0
    %2084 = vmatprep.subr.bf16.mxu0 0
    %2085 = vmatpush1.bf16.msra.mxu0 0
    %2086 = vmatprep.subr.bf16.mxu0 0
    %2087 = vmatpush1.bf16.msra.mxu0 0
    %2088 = vmatprep.subr.bf16.mxu0 0
    %2089 = vmatpush1.bf16.msra.mxu0 0
    %2090 = vmatprep.subr.bf16.mxu0 0
    %2091 = vmatpush1.bf16.msra.mxu0 0
    %2092 = vmatprep.subr.bf16.mxu0 0
    %2093 = vmatpush1.bf16.msra.mxu0 0
    %2094 = vmatprep.mubr.bf16.mxu0 0
    %2095 = vmatmul.mubr.bf16.gmra.mrb[0].mxu0 %v2060
    %v2096 = vpop.f32.mrb[0].mxu0
    %v2097 = vadd.f32 %v2046, %v2096
    %v2098 = vpop.f32.mrb[0].mxu0
    %v2099 = vpop.f32.mrb[0].mxu0
    %v2100 = vpop.f32.mrb[0].mxu0
    %2101 = vdwg.mxu0
    %v2102 = vmax.f32 %v2097, 0.0
    %2103 = vst [vmem:[#allocation7] sm:$0x3] %v2102
    // Predicated region
    $region26: #{bert_classifier_forward.1} parent=1 // pred_check
      _
    $region27: #{bert_classifier_forward.1} parent=1 // pred_check_branch
      %2105 = sbr.rel (0) target = $region29
    $region28: #{bert_classifier_forward.1} parent=1 // pred_region
      %s2107 = ssub.s32 32, 32
      %2108 = vsyncadd [#allocation4], %s2107
      %s2110 = sshll.u32 [#allocation7], 4
      %s2111 = int_to_ptr.vmem [resolvable:$true] %s2110
      %2113 = dma.vmem_to_hbm [thread:$0]  %s2111, 32, %s4, [#allocation4]
    $region29: #{bert_classifier_forward.1} parent=1 // pred_fallthru
      _
    // Predicated region
    $region30: #{bert_classifier_forward.1} parent=1 // pred_check
      _
    $region31: #{bert_classifier_forward.1} parent=1 // pred_check_branch
      %2115 = sbr.rel (0) target = $region33
    $region32: #{bert_classifier_forward.1} parent=1 // pred_region
      %2116 = dma.done [#allocation4], 32
    $region33: #{bert_classifier_forward.1} parent=1 // pred_fallthru
      _
    %2117 = vsyncpa [#allocation3], 1
    %2118 = vsyncpa [#allocation6], 1
    %2119 = vsyncpa [#allocation4], 1

</llo_original>
